<compile_context>
chip_gen: v7x
topology: tpu7x:2x2x1
jax: 0.10.0
libtpu: 0.0.40
codegen_flags: <defaults>
</compile_context>

<pallas_src>
import math

import jax
import jax.numpy as jnp
from jax.experimental import pallas as pl
from jax.experimental.pallas import tpu as pltpu

_LANE = 128
_SUBLANE = 8


def _round_up(x, m):
    return (x + m - 1) // m * m


def _xavier_uniform(key, fan_in, fan_out):
    """nn.init.xavier_uniform_ equivalent; [in, out] layout so y = x @ w."""
    bound = math.sqrt(6.0 / (fan_in + fan_out))
    return jax.random.uniform(key, (fan_in, fan_out), jnp.float32, -bound, bound)


# ---------------------------------------------------------------------------
# Kernel
# ---------------------------------------------------------------------------
def _time_embedding_kernel(t_ref, freq_ref, phase_ref, w1_ref, b1_ref,
                           w2_ref, b2_ref, out_ref):
    """Fused sinusoidal embedding + Linear/Swish/Linear for one batch tile.

    t_ref     : (tb, 1)             int32    timestep indices
    freq_ref  : (1, d_model_p)      float32  interleaved [w0, w0, w1, w1, ...]
    phase_ref : (1, d_model_p)      float32  interleaved [0, pi/2, 0, pi/2, ...]
    w1_ref    : (d_model_p, dim_p)  bfloat16
    b1_ref    : (1, dim_p)          float32
    w2_ref    : (dim_p, dim_p)      bfloat16
    b2_ref    : (1, dim_p)          float32
    out_ref   : (tb, dim_p)         float32
    """
    # Sinusoidal embedding computed directly (no table, no gather). Padded
    # columns have freq = phase = 0 -> sin(0) = 0, and the matching w1 rows
    # are zero anyway, so padding is numerically inert.
    t_f = t_ref[...].astype(jnp.float32)                      # (tb, 1)
    ang = t_f * freq_ref[...] + phase_ref[...]                # (tb, d_model_p)
    emb = jnp.sin(ang)                                        # f32, EUP

    # Linear(d_model, dim): bf16 MXU operands, f32 accumulation; bias + Swish
    # stay f32 (v5e has no bf16 VPU/EUP).
    h = jnp.dot(emb.astype(jnp.bfloat16), w1_ref[...],
                preferred_element_type=jnp.float32) + b1_ref[...]
    h = h * jax.nn.sigmoid(h)                                 # Swish

    # Linear(dim, dim).
    o = jnp.dot(h.astype(jnp.bfloat16), w2_ref[...],
                preferred_element_type=jnp.float32) + b2_ref[...]
    out_ref[...] = o.astype(out_ref.dtype)


# ---------------------------------------------------------------------------
# pallas_call launcher
# ---------------------------------------------------------------------------
def _launch(t_p, freq_p, phase_p, w1_p, b1_p, w2_p, b2_p, *, tb,
            single_buffer_weights):
    B_p = t_p.shape[0]
    n_b = B_p // tb
    d_model_p = freq_p.shape[1]
    dim_p = w1_p.shape[1]

    if single_buffer_weights:
        # Constant-index operands: a single VMEM buffer is enough — double
        # buffering them is pure VMEM waste (w2 alone is dim_p^2 * 2 B).
        def resident(shape):
            return pl.BlockSpec(shape, lambda i: (0, 0),
                                pipeline_mode=pl.Buffered(1))
    else:
        def resident(shape):
            return pl.BlockSpec(shape, lambda i: (0, 0))

    # Explicit VMEM budget: resident weights + pipelined t/out tiles + margin.
    resident_bytes = ((freq_p.size + phase_p.size + b1_p.size + b2_p.size) * 4
                      + (w1_p.size + w2_p.size) * 2)
    io_bytes = 2 * (tb * 4 + tb * dim_p * 4)
    scratch_bytes = tb * (d_model_p + 2 * dim_p) * 4
    vmem_limit = int(min(128 * 1024 * 1024,
                         max(32 * 1024 * 1024,
                             2 * (resident_bytes + io_bytes + scratch_bytes))))

    cost = pl.CostEstimate(
        flops=2 * B_p * (d_model_p * dim_p + dim_p * dim_p),
        transcendentals=B_p * (d_model_p + dim_p),             # sin + sigmoid
        bytes_accessed=(B_p * 4
                        + (freq_p.size + phase_p.size) * 4
                        + w1_p.size * 2 + w2_p.size * 2
                        + (b1_p.size + b2_p.size) * 4
                        + B_p * dim_p * 4),
    )

    return pl.pallas_call(
        _time_embedding_kernel,
        out_shape=jax.ShapeDtypeStruct((B_p, dim_p), jnp.float32),
        grid_spec=pltpu.PrefetchScalarGridSpec(
            num_scalar_prefetch=0,
            grid=(n_b,),
            in_specs=[
                pl.BlockSpec((tb, 1), lambda i: (i, 0)),       # t tile (pipelined)
                resident((1, d_model_p)),                      # freq (VMEM-resident)
                resident((1, d_model_p)),                      # phase
                resident((d_model_p, dim_p)),                  # w1
                resident((1, dim_p)),                          # b1
                resident((dim_p, dim_p)),                      # w2
                resident((1, dim_p)),                          # b2
            ],
            out_specs=pl.BlockSpec((tb, dim_p), lambda i: (i, 0)),
        ),
        compiler_params=pltpu.CompilerParams(
            dimension_semantics=("parallel",),   # batch tiles -> both TCs on v7x
            vmem_limit_bytes=vmem_limit,
        ),
        cost_estimate=cost,
    )(t_p, freq_p, phase_p, w1_p, b1_p, w2_p, b2_p)


def time_embedding_forward(t, freq_p, phase_p, w1_p, b1_p, w2_p, b2_p, *,
                           dim, batch_tile=128):
    """Forward path only: pad `t`, launch the fused kernel, trim padding."""
    (B,) = t.shape
    dim_p = w1_p.shape[1]

    # Batch tiling: at least 2 grid steps whenever B >= 16 so the "parallel"
    # batch axis can use both v7x TensorCores and DMAs overlap with compute.
    B_p8 = _round_up(B, _SUBLANE)
    if B_p8 >= 2 * _SUBLANE:
        tb = min(batch_tile, _round_up((B_p8 + 1) // 2, _SUBLANE))
    else:
        tb = B_p8
    B_p = _round_up(B_p8, tb)

    t_p = jnp.zeros((B_p, 1), jnp.int32).at[:B, 0].set(t.astype(jnp.int32))

    try:
        out_p = _launch(t_p, freq_p, phase_p, w1_p, b1_p, w2_p, b2_p,
                        tb=tb, single_buffer_weights=True)
    except Exception:
        # pipeline_mode=pl.Buffered(1) not supported on this JAX version:
        # fall back to the known-good default (double-buffered) specs.
        out_p = _launch(t_p, freq_p, phase_p, w1_p, b1_p, w2_p, b2_p,
                        tb=tb, single_buffer_weights=False)

    if B_p == B and dim_p == dim:
        return out_p
    if dim_p == dim:
        return out_p[:B]              # slice only the batch axis
    return out_p[:B, :dim]


# ---------------------------------------------------------------------------
# Module wrapper: all padding / casting hoisted to construction time
# ---------------------------------------------------------------------------
class TimeEmbeddingPallas:
    """DDPM TimeEmbedding (sinusoid -> Linear -> Swish -> Linear), fully fused."""

    def __init__(self, T, d_model, dim, *, key, batch_tile=128):
        assert d_model % 2 == 0
        self.T, self.d_model, self.dim = T, d_model, dim
        self.batch_tile = batch_tile
        d_model_p = _round_up(d_model, _LANE)
        dim_p = _round_up(dim, _LANE)

        # PyTorch-equivalent init (xavier_uniform_, zero bias); f32 masters.
        k1, k2 = jax.random.split(key)
        self.w1 = _xavier_uniform(k1, d_model, dim)
        self.b1 = jnp.zeros((dim,), jnp.float32)
        self.w2 = _xavier_uniform(k2, dim, dim)
        self.b2 = jnp.zeros((dim,), jnp.float32)

        # Sinusoid parameters replacing the Embedding table:
        #   emb[t, 2i] = sin(t * w_i), emb[t, 2i+1] = cos(t * w_i)
        w = jnp.exp(-jnp.arange(0, d_model, 2, dtype=jnp.float32)
                    / d_model * math.log(10000.0))              # [d_model // 2]
        freq = jnp.stack([w, w], axis=-1).reshape(d_model)
        phase = jnp.stack([jnp.zeros_like(w),
                           jnp.full_like(w, math.pi / 2)], axis=-1).reshape(d_model)

        # One-time pad + cast (hoisted out of the forward path). bf16 weights
        # halve HBM traffic; sinusoid params / biases stay f32.
        self.freq_p = jnp.zeros((1, d_model_p), jnp.float32).at[0, :d_model].set(freq)
        self.phase_p = jnp.zeros((1, d_model_p), jnp.float32).at[0, :d_model].set(phase)
        self.w1_p = (jnp.zeros((d_model_p, dim_p), jnp.bfloat16)
                     .at[:d_model, :dim].set(self.w1.astype(jnp.bfloat16)))
        self.w2_p = (jnp.zeros((dim_p, dim_p), jnp.bfloat16)
                     .at[:dim, :dim].set(self.w2.astype(jnp.bfloat16)))
        self.b1_p = jnp.zeros((1, dim_p), jnp.float32).at[0, :dim].set(self.b1)
        self.b2_p = jnp.zeros((1, dim_p), jnp.float32).at[0, :dim].set(self.b2)

    def __call__(self, t):
        # Note: t >= T simply extrapolates the sinusoid (no gather -> no OOB),
        # unlike nn.Embedding which would raise for out-of-range indices.
        return time_embedding_forward(
            t, self.freq_p, self.phase_p, self.w1_p, self.b1_p,
            self.w2_p, self.b2_p, dim=self.dim, batch_tile=self.batch_tile)


def _build_sinusoidal_table(T, d_model):
    """Exactly mirrors the PyTorch constructor (f32), for the reference check."""
    freqs = jnp.exp(-jnp.arange(0, d_model, 2, dtype=jnp.float32)
                    / d_model * math.log(10000.0))
    pos = jnp.arange(T, dtype=jnp.float32)
    ang = pos[:, None] * freqs[None, :]
    emb = jnp.stack([jnp.sin(ang), jnp.cos(ang)], axis=-1)
    return emb.reshape(T, d_model)


if __name__ == "__main__":
    # Small, forward-consistent shapes (B=16 exercises the 2-step grid path).
    T, d_model, dim, B = 16, 32, 64, 16

    key = jax.random.PRNGKey(0)
    k_t, k_params = jax.random.split(key)
    t = jax.random.randint(k_t, (B,), 0, T, dtype=jnp.int32)

    mod = TimeEmbeddingPallas(T, d_model, dim, key=k_params)
    out = jax.block_until_ready(mod(t))
    assert out.shape == (B, dim)

    # Reference 1: mirrors the kernel's mixed precision (f32 sinusoid, bf16
    # matmul operands, f32 accumulation / bias / Swish) -> tight tolerance.
    freq = mod.freq_p[0, :d_model]
    phase = mod.phase_p[0, :d_model]
    emb_m = jnp.sin(t.astype(jnp.float32)[:, None] * freq[None, :] + phase[None, :])
    h_m = jnp.dot(emb_m.astype(jnp.bfloat16), mod.w1.astype(jnp.bfloat16),
                  preferred_element_type=jnp.float32) + mod.b1[None, :]
    h_m = h_m * jax.nn.sigmoid(h_m)
    ref_m = jnp.dot(h_m.astype(jnp.bfloat16), mod.w2.astype(jnp.bfloat16),
                    preferred_element_type=jnp.float32) + mod.b2[None, :]

    # Reference 2: PyTorch-exact f32 path (table gather + f32 Linear/Swish/Linear).
    table = _build_sinusoidal_table(T, d_model)
    emb_f = table[t]
    h_f = emb_f @ mod.w1 + mod.b1[None, :]
    h_f = h_f * jax.nn.sigmoid(h_f)
    ref_f = h_f @ mod.w2 + mod.b2[None, :]

    assert jnp.allclose(out, ref_m, atol=2e-2, rtol=2e-2), "mismatch vs mixed-precision reference"
    assert jnp.allclose(out, ref_f, atol=5e-2, rtol=5e-2), "mismatch vs f32 PyTorch reference"

    print("KERNEL_OK")
</pallas_src>

<mosaic_0001>
module attributes {stable_mosaic.version = 11 : i64} {
  func.func @_time_embedding_kernel(%arg0: i32, %arg1: memref<8x1xi32, #tpu.memory_space<vmem>>, %arg2: memref<1x128xf32, #tpu.memory_space<vmem>>, %arg3: memref<1x128xf32, #tpu.memory_space<vmem>>, %arg4: memref<128x128xbf16, #tpu.memory_space<vmem>>, %arg5: memref<1x128xf32, #tpu.memory_space<vmem>>, %arg6: memref<128x128xbf16, #tpu.memory_space<vmem>>, %arg7: memref<1x128xf32, #tpu.memory_space<vmem>>, %arg8: memref<8x128xf32, #tpu.memory_space<vmem>>) attributes {dimension_semantics = [#tpu.dimension_semantics<parallel>], iteration_bounds = array<i64: 2>, scalar_prefetch = 0 : i64, scratch_operands = 0 : i64, tpu.core_type = #tpu.core_type<tc>, window_params = [{transform_indices = @transform_0, window_bounds = array<i64: 8, 1>}, {pipeline_mode = #tpu.pipeline_mode<synchronous>, transform_indices = @transform_1, window_bounds = array<i64: 1, 128>}, {pipeline_mode = #tpu.pipeline_mode<synchronous>, transform_indices = @transform_2, window_bounds = array<i64: 1, 128>}, {pipeline_mode = #tpu.pipeline_mode<synchronous>, transform_indices = @transform_3, window_bounds = array<i64: 128, 128>}, {pipeline_mode = #tpu.pipeline_mode<synchronous>, transform_indices = @transform_4, window_bounds = array<i64: 1, 128>}, {pipeline_mode = #tpu.pipeline_mode<synchronous>, transform_indices = @transform_5, window_bounds = array<i64: 128, 128>}, {pipeline_mode = #tpu.pipeline_mode<synchronous>, transform_indices = @transform_6, window_bounds = array<i64: 1, 128>}, {transform_indices = @transform_7, window_bounds = array<i64: 8, 128>}]} {
    %c0 = arith.constant 0 : index
    %c0_0 = arith.constant 0 : index
    %0 = vector.load %arg1[%c0, %c0_0] : memref<8x1xi32, #tpu.memory_space<vmem>>, vector<8x1xi32>
    %1 = arith.sitofp %0 : vector<8x1xi32> to vector<8x1xf32>
    %c0_1 = arith.constant 0 : index
    %c0_2 = arith.constant 0 : index
    %2 = vector.load %arg2[%c0_1, %c0_2] : memref<1x128xf32, #tpu.memory_space<vmem>>, vector<1x128xf32>
    %3 = vector.broadcast %1 : vector<8x1xf32> to vector<8x128xf32>
    %4 = vector.broadcast %2 : vector<1x128xf32> to vector<8x128xf32>
    %5 = arith.mulf %3, %4 : vector<8x128xf32>
    %c0_3 = arith.constant 0 : index
    %c0_4 = arith.constant 0 : index
    %6 = vector.load %arg3[%c0_3, %c0_4] : memref<1x128xf32, #tpu.memory_space<vmem>>, vector<1x128xf32>
    %7 = vector.broadcast %6 : vector<1x128xf32> to vector<8x128xf32>
    %8 = arith.addf %5, %7 : vector<8x128xf32>
    %9 = math.sin %8 : vector<8x128xf32>
    %10 = arith.truncf %9 : vector<8x128xf32> to vector<8x128xbf16>
    %c0_5 = arith.constant 0 : index
    %c0_6 = arith.constant 0 : index
    %11 = vector.load %arg4[%c0_5, %c0_6] : memref<128x128xbf16, #tpu.memory_space<vmem>>, vector<128x128xbf16>
    %cst = arith.constant dense<0.000000e+00> : vector<8x128xf32>
    %12 = tpu.matmul %10, %11, %cst {dimension_numbers = #tpu.dot_dimension_numbers<[1], [0], [0], [1], [0, 0, 1, 1], [], []>} : vector<8x128xbf16>, vector<128x128xbf16>, vector<8x128xf32> -> vector<8x128xf32>
    %c0_7 = arith.constant 0 : index
    %c0_8 = arith.constant 0 : index
    %13 = vector.load %arg5[%c0_7, %c0_8] : memref<1x128xf32, #tpu.memory_space<vmem>>, vector<1x128xf32>
    %14 = vector.broadcast %13 : vector<1x128xf32> to vector<8x128xf32>
    %15 = arith.addf %12, %14 : vector<8x128xf32>
    %16 = arith.negf %15 : vector<8x128xf32>
    %17 = math.exp %16 : vector<8x128xf32>
    %cst_9 = arith.constant 1.000000e+00 : f32
    %18 = vector.broadcast %cst_9 : f32 to vector<8x128xf32>
    %19 = arith.addf %18, %17 : vector<8x128xf32>
    %20 = arith.divf %18, %19 : vector<8x128xf32>
    %21 = arith.mulf %15, %20 : vector<8x128xf32>
    %22 = arith.truncf %21 : vector<8x128xf32> to vector<8x128xbf16>
    %c0_10 = arith.constant 0 : index
    %c0_11 = arith.constant 0 : index
    %23 = vector.load %arg6[%c0_10, %c0_11] : memref<128x128xbf16, #tpu.memory_space<vmem>>, vector<128x128xbf16>
    %cst_12 = arith.constant dense<0.000000e+00> : vector<8x128xf32>
    %24 = tpu.matmul %22, %23, %cst_12 {dimension_numbers = #tpu.dot_dimension_numbers<[1], [0], [0], [1], [0, 0, 1, 1], [], []>} : vector<8x128xbf16>, vector<128x128xbf16>, vector<8x128xf32> -> vector<8x128xf32>
    %c0_13 = arith.constant 0 : index
    %c0_14 = arith.constant 0 : index
    %25 = vector.load %arg7[%c0_13, %c0_14] : memref<1x128xf32, #tpu.memory_space<vmem>>, vector<1x128xf32>
    %26 = vector.broadcast %25 : vector<1x128xf32> to vector<8x128xf32>
    %27 = arith.addf %24, %26 : vector<8x128xf32>
    %c0_15 = arith.constant 0 : index
    %c0_16 = arith.constant 0 : index
    %28 = vector.load %arg8[%c0_15, %c0_16] : memref<8x128xf32, #tpu.memory_space<vmem>>, vector<8x128xf32>
    tpu.vector_store %arg8[%c0_15, %c0_16], %27 {strides = array<i32>} : memref<8x128xf32, #tpu.memory_space<vmem>>, vector<8x128xf32>,
    return
  }
  func.func @transform_0(%arg0: i32) -> (i32, i32) {
    %c0_i32 = arith.constant 0 : i32
    %c0_i32_0 = arith.constant 0 : i32
    return %arg0, %c0_i32 : i32, i32
  }
  func.func @transform_1(%arg0: i32) -> (i32, i32) {
    %c0_i32 = arith.constant 0 : i32
    %c0_i32_0 = arith.constant 0 : i32
    %c0_i32_1 = arith.constant 0 : i32
    return %c0_i32, %c0_i32_0 : i32, i32
  }
  func.func @transform_2(%arg0: i32) -> (i32, i32) {
    %c0_i32 = arith.constant 0 : i32
    %c0_i32_0 = arith.constant 0 : i32
    %c0_i32_1 = arith.constant 0 : i32
    return %c0_i32, %c0_i32_0 : i32, i32
  }
  func.func @transform_3(%arg0: i32) -> (i32, i32) {
    %c0_i32 = arith.constant 0 : i32
    %c0_i32_0 = arith.constant 0 : i32
    %c0_i32_1 = arith.constant 0 : i32
    return %c0_i32, %c0_i32_0 : i32, i32
  }
  func.func @transform_4(%arg0: i32) -> (i32, i32) {
    %c0_i32 = arith.constant 0 : i32
    %c0_i32_0 = arith.constant 0 : i32
    %c0_i32_1 = arith.constant 0 : i32
    return %c0_i32, %c0_i32_0 : i32, i32
  }
  func.func @transform_5(%arg0: i32) -> (i32, i32) {
    %c0_i32 = arith.constant 0 : i32
    %c0_i32_0 = arith.constant 0 : i32
    %c0_i32_1 = arith.constant 0 : i32
    return %c0_i32, %c0_i32_0 : i32, i32
  }
  func.func @transform_6(%arg0: i32) -> (i32, i32) {
    %c0_i32 = arith.constant 0 : i32
    %c0_i32_0 = arith.constant 0 : i32
    %c0_i32_1 = arith.constant 0 : i32
    return %c0_i32, %c0_i32_0 : i32, i32
  }
  func.func @transform_7(%arg0: i32) -> (i32, i32) {
    %c0_i32 = arith.constant 0 : i32
    %c0_i32_0 = arith.constant 0 : i32
    return %arg0, %c0_i32 : i32, i32
  }
}

module attributes {stable_mosaic.version = 11 : i64} {
  func.func @_time_embedding_kernel(%arg0: i32, %arg1: memref<8x1xi32, #tpu.memory_space<vmem>>, %arg2: memref<1x128xf32, #tpu.memory_space<vmem>>, %arg3: memref<1x128xf32, #tpu.memory_space<vmem>>, %arg4: memref<128x128xbf16, #tpu.memory_space<vmem>>, %arg5: memref<1x128xf32, #tpu.memory_space<vmem>>, %arg6: memref<128x128xbf16, #tpu.memory_space<vmem>>, %arg7: memref<1x128xf32, #tpu.memory_space<vmem>>, %arg8: memref<8x128xf32, #tpu.memory_space<vmem>>) attributes {dimension_semantics = [#tpu.dimension_semantics<parallel>], iteration_bounds = array<i64: 2>, scalar_prefetch = 0 : i64, scratch_operands = 0 : i64, tpu.core_type = #tpu.core_type<tc>, window_params = [{transform_indices = @transform_0, window_bounds = array<i64: 8, 1>}, {pipeline_mode = #tpu.pipeline_mode<synchronous>, transform_indices = @transform_1, window_bounds = array<i64: 1, 128>}, {pipeline_mode = #tpu.pipeline_mode<synchronous>, transform_indices = @transform_2, window_bounds = array<i64: 1, 128>}, {pipeline_mode = #tpu.pipeline_mode<synchronous>, transform_indices = @transform_3, window_bounds = array<i64: 128, 128>}, {pipeline_mode = #tpu.pipeline_mode<synchronous>, transform_indices = @transform_4, window_bounds = array<i64: 1, 128>}, {pipeline_mode = #tpu.pipeline_mode<synchronous>, transform_indices = @transform_5, window_bounds = array<i64: 128, 128>}, {pipeline_mode = #tpu.pipeline_mode<synchronous>, transform_indices = @transform_6, window_bounds = array<i64: 1, 128>}, {transform_indices = @transform_7, window_bounds = array<i64: 8, 128>}]} {
    %c0 = arith.constant 0 : index
    %c0_0 = arith.constant 0 : index
    %0 = vector.load %arg1[%c0, %c0_0] : memref<8x1xi32, #tpu.memory_space<vmem>>, vector<8x1xi32>
    %1 = arith.sitofp %0 : vector<8x1xi32> to vector<8x1xf32>
    %c0_1 = arith.constant 0 : index
    %c0_2 = arith.constant 0 : index
    %2 = vector.load %arg2[%c0_1, %c0_2] : memref<1x128xf32, #tpu.memory_space<vmem>>, vector<1x128xf32>
    %3 = vector.broadcast %1 : vector<8x1xf32> to vector<8x128xf32>
    %4 = vector.broadcast %2 : vector<1x128xf32> to vector<8x128xf32>
    %5 = arith.mulf %3, %4 : vector<8x128xf32>
    %c0_3 = arith.constant 0 : index
    %c0_4 = arith.constant 0 : index
    %6 = vector.load %arg3[%c0_3, %c0_4] : memref<1x128xf32, #tpu.memory_space<vmem>>, vector<1x128xf32>
    %7 = vector.broadcast %6 : vector<1x128xf32> to vector<8x128xf32>
    %8 = arith.addf %5, %7 : vector<8x128xf32>
    %9 = math.sin %8 : vector<8x128xf32>
    %10 = arith.truncf %9 : vector<8x128xf32> to vector<8x128xbf16>
    %c0_5 = arith.constant 0 : index
    %c0_6 = arith.constant 0 : index
    %11 = vector.load %arg4[%c0_5, %c0_6] : memref<128x128xbf16, #tpu.memory_space<vmem>>, vector<128x128xbf16>
    %cst = arith.constant dense<0.000000e+00> : vector<8x128xf32>
    %12 = tpu.matmul %10, %11, %cst {dimension_numbers = #tpu.dot_dimension_numbers<[1], [0], [0], [1], [0, 0, 1, 1], [], []>} : vector<8x128xbf16>, vector<128x128xbf16>, vector<8x128xf32> -> vector<8x128xf32>
    %c0_7 = arith.constant 0 : index
    %c0_8 = arith.constant 0 : index
    %13 = vector.load %arg5[%c0_7, %c0_8] : memref<1x128xf32, #tpu.memory_space<vmem>>, vector<1x128xf32>
    %14 = vector.broadcast %13 : vector<1x128xf32> to vector<8x128xf32>
    %15 = arith.addf %12, %14 : vector<8x128xf32>
    %16 = arith.negf %15 : vector<8x128xf32>
    %17 = math.exp %16 : vector<8x128xf32>
    %cst_9 = arith.constant 1.000000e+00 : f32
    %18 = vector.broadcast %cst_9 : f32 to vector<8x128xf32>
    %19 = arith.addf %18, %17 : vector<8x128xf32>
    %20 = arith.divf %18, %19 : vector<8x128xf32>
    %21 = arith.mulf %15, %20 : vector<8x128xf32>
    %22 = arith.truncf %21 : vector<8x128xf32> to vector<8x128xbf16>
    %c0_10 = arith.constant 0 : index
    %c0_11 = arith.constant 0 : index
    %23 = vector.load %arg6[%c0_10, %c0_11] : memref<128x128xbf16, #tpu.memory_space<vmem>>, vector<128x128xbf16>
    %cst_12 = arith.constant dense<0.000000e+00> : vector<8x128xf32>
    %24 = tpu.matmul %22, %23, %cst_12 {dimension_numbers = #tpu.dot_dimension_numbers<[1], [0], [0], [1], [0, 0, 1, 1], [], []>} : vector<8x128xbf16>, vector<128x128xbf16>, vector<8x128xf32> -> vector<8x128xf32>
    %c0_13 = arith.constant 0 : index
    %c0_14 = arith.constant 0 : index
    %25 = vector.load %arg7[%c0_13, %c0_14] : memref<1x128xf32, #tpu.memory_space<vmem>>, vector<1x128xf32>
    %26 = vector.broadcast %25 : vector<1x128xf32> to vector<8x128xf32>
    %27 = arith.addf %24, %26 : vector<8x128xf32>
    %c0_15 = arith.constant 0 : index
    %c0_16 = arith.constant 0 : index
    %28 = vector.load %arg8[%c0_15, %c0_16] : memref<8x128xf32, #tpu.memory_space<vmem>>, vector<8x128xf32>
    tpu.vector_store %arg8[%c0_15, %c0_16], %27 {strides = array<i32>} : memref<8x128xf32, #tpu.memory_space<vmem>>, vector<8x128xf32>,
    return
  }
  func.func @transform_0(%arg0: i32) -> (i32, i32) {
    %c0_i32 = arith.constant 0 : i32
    %c0_i32_0 = arith.constant 0 : i32
    return %arg0, %c0_i32 : i32, i32
  }
  func.func @transform_1(%arg0: i32) -> (i32, i32) {
    %c0_i32 = arith.constant 0 : i32
    %c0_i32_0 = arith.constant 0 : i32
    %c0_i32_1 = arith.constant 0 : i32
    return %c0_i32, %c0_i32_0 : i32, i32
  }
  func.func @transform_2(%arg0: i32) -> (i32, i32) {
    %c0_i32 = arith.constant 0 : i32
    %c0_i32_0 = arith.constant 0 : i32
    %c0_i32_1 = arith.constant 0 : i32
    return %c0_i32, %c0_i32_0 : i32, i32
  }
  func.func @transform_3(%arg0: i32) -> (i32, i32) {
    %c0_i32 = arith.constant 0 : i32
    %c0_i32_0 = arith.constant 0 : i32
    %c0_i32_1 = arith.constant 0 : i32
    return %c0_i32, %c0_i32_0 : i32, i32
  }
  func.func @transform_4(%arg0: i32) -> (i32, i32) {
    %c0_i32 = arith.constant 0 : i32
    %c0_i32_0 = arith.constant 0 : i32
    %c0_i32_1 = arith.constant 0 : i32
    return %c0_i32, %c0_i32_0 : i32, i32
  }
  func.func @transform_5(%arg0: i32) -> (i32, i32) {
    %c0_i32 = arith.constant 0 : i32
    %c0_i32_0 = arith.constant 0 : i32
    %c0_i32_1 = arith.constant 0 : i32
    return %c0_i32, %c0_i32_0 : i32, i32
  }
  func.func @transform_6(%arg0: i32) -> (i32, i32) {
    %c0_i32 = arith.constant 0 : i32
    %c0_i32_0 = arith.constant 0 : i32
    %c0_i32_1 = arith.constant 0 : i32
    return %c0_i32, %c0_i32_0 : i32, i32
  }
  func.func @transform_7(%arg0: i32) -> (i32, i32) {
    %c0_i32 = arith.constant 0 : i32
    %c0_i32_0 = arith.constant 0 : i32
    return %arg0, %c0_i32 : i32, i32
  }
}

</mosaic_0001>

<llo_original>
// kernel: tpu_custom_call.1
$region0: #{tpu_custom_call.1}
  #allocation0 [shape = 'u32[]', space=smem, size = 0x4, offset = 0x4, fixed_abs, tag = 'smem constant byte address 0x4 - core index']
  #allocation1 [shape = 'u32[144,128]{1,0:T(1,128)}', space=vmem, size = 0x12000, scoped, tag = 'internal scratch']
  %s0 = inlined_call_operand.vmem [shape: s32[16,1], index: 0, kind: input, shape index: {}]
  %s1 = inlined_call_operand.vmem [shape: f32[1,128], index: 1, kind: input, shape index: {}]
  %s2 = inlined_call_operand.vmem [shape: f32[1,128], index: 2, kind: input, shape index: {}]
  %s3 = inlined_call_operand.hbm [shape: bf16[128,128], index: 3, kind: input, shape index: {}]
  %s4 = inlined_call_operand.vmem [shape: f32[1,128], index: 4, kind: input, shape index: {}]
  %s5 = inlined_call_operand.hbm [shape: bf16[128,128], index: 5, kind: input, shape index: {}]
  %s6 = inlined_call_operand.vmem [shape: f32[1,128], index: 6, kind: input, shape index: {}]
  %s7 = inlined_call_operand.hbm [shape: f32[16,128], index: 7, kind: output, shape index: {}]
  %s8 = sld [smem:[#allocation0]]
  $region69: #{tpu_custom_call.1} parent=0
    _
  %s10 = ssub.s32 1, %s8
  %s11 = scalar_select 0, %s10, %s8
  $region1: #{tpu_custom_call.1} parent=0
    #allocation2 [shape = 'u8[32768]{0}', space=vmem, size = 0x8000, scoped, tag = 'input window, operand 3, single buffered']
    #allocation3 [shape = 's32[2]{0}', space=sflag, size = 0x8, scoped, tag = 'scoped memory for tpu_custom_call.1']
    #allocation4 [shape = 's32[2]{0}', space=sflag, size = 0x8, scoped, tag = 'scoped memory for tpu_custom_call.1']
    #allocation5 [shape = 'u8[32768]{0}', space=vmem, size = 0x8000, scoped, tag = 'input window, operand 5, single buffered']
    #allocation6 [shape = 's32[1]{0}', space=sflag, size = 0x4, scoped, tag = 'scoped memory for tpu_custom_call.1']
    #allocation7 [shape = 'u8[8192]{0}', space=vmem, size = 0x2000, scoped, tag = 'output window, operand 0']
    %12 = vsyncpa [#allocation3], 0
    %13 = vsyncpa [#allocation6], 0
    %14 = vsyncpa [#allocation4], 0
    %s15 = scalar_lea.sflag [#allocation4], 1
    %16 = vsyncpa %s15, 0
    loop: start=0, step=1, limit=4
    $region2: #{tpu_custom_call.1} parent=1 // loop_pre_header
      _
    $region3: #{tpu_custom_call.1} parent=1 // loop_header
      %s18 = sphi 0, %s22
      %p19 = scmp.ge.s32.totalorder %s18, 4
      %s28 = sphi 0, %s30
      %s31 = sphi 0, %s28
      %s32 = sphi 0, %s31
      %s48 = sphi 0, %s32
      %s52 = sphi 0, %s52
      %s54 = sphi 0, %s52
      %s55 = sphi 0, %s54
      %s69 = sphi 0, %s55
      %s73 = sphi 0, %s73
      %s75 = sphi 0, %s73
      %s76 = sphi 0, %s75
      %s90 = sphi 0, %s76
      %s94 = sphi 0, %s94
      %s96 = sphi 0, %s94
      %s97 = sphi 0, %s96
      %s111 = sphi 0, %s97
      %s115 = sphi 0, %s115
      %s117 = sphi 0, %s115
      %s118 = sphi 0, %s117
      %s132 = sphi 0, %s118
      %s136 = sphi 0, %s136
      %s138 = sphi 0, %s136
      %s139 = sphi 0, %s138
      %s153 = sphi 0, %s139
      %s157 = sphi 0, %s157
      %s159 = sphi 0, %s157
      %s160 = sphi 0, %s159
      %s174 = sphi 0, %s160
      %s180 = sphi 0, %s182
      %s183 = sphi 0, %s180
      %s184 = sphi 0, %s183
      %s200 = sphi 0, %s184
    $region4: #{tpu_custom_call.1} parent=1 // loop_header_branch
      %21 = sbr.rel (%p19) target = $region8
    $region5: #{tpu_custom_call.1} parent=1 // loop_body
      %s23 = ssub.s32 %s18, 1
      %s24 = ssub.s32 %s18, 2
      %s25 = sadd.s32 %s18, 1
      %s26 = ssub.s32 %s18, %s25
      %p27 = scmp.eq.s32.totalorder %s26, 0
      %s29 = sadd.s32 %s28, 1
      %s30 = scalar_select %p27, %s28, %s29
      %p33 = pneg %p27
      %p34 = scmp.eq.s32.totalorder %s18, 1
      %p35 = por %p33, %p34
      %p36 = scmp.ne.s32.totalorder %s28, %s31
      %p37 = scmp.eq.s32.totalorder %s18, 0
      %p38 = por %p36, %p37
      %p39 = scmp.ne.s32.totalorder %s28, %s31
      %p40 = scmp.eq.s32.totalorder %s23, 1
      %p41 = por %p39, %p40
      %p42 = scmp.ne.s32.totalorder %s31, %s32
      %p43 = scmp.eq.s32.totalorder %s23, 0
      %p44 = por %p42, %p43
      %p45 = scmp.ne.s32.totalorder %s31, %s32
      %p46 = scmp.eq.s32.totalorder %s24, 1
      %p47 = por %p45, %p46
      %p49 = scmp.ne.s32.totalorder %s32, %s48
      %p50 = scmp.eq.s32.totalorder %s24, 0
      %p51 = por %p49, %p50
      %s53 = sadd.s32 %s52, 1
      %p56 = scmp.eq.s32.totalorder %s18, 1
      %p57 = scmp.ne.s32.totalorder %s52, %s54
      %p58 = scmp.eq.s32.totalorder %s18, 0
      %p59 = por %p57, %p58
      %p60 = scmp.ne.s32.totalorder %s52, %s54
      %p61 = scmp.eq.s32.totalorder %s23, 1
      %p62 = por %p60, %p61
      %p63 = scmp.ne.s32.totalorder %s54, %s55
      %p64 = scmp.eq.s32.totalorder %s23, 0
      %p65 = por %p63, %p64
      %p66 = scmp.ne.s32.totalorder %s54, %s55
      %p67 = scmp.eq.s32.totalorder %s24, 1
      %p68 = por %p66, %p67
      %p70 = scmp.ne.s32.totalorder %s55, %s69
      %p71 = scmp.eq.s32.totalorder %s24, 0
      %p72 = por %p70, %p71
      %s74 = sadd.s32 %s73, 1
      %p77 = scmp.eq.s32.totalorder %s18, 1
      %p78 = scmp.ne.s32.totalorder %s73, %s75
      %p79 = scmp.eq.s32.totalorder %s18, 0
      %p80 = por %p78, %p79
      %p81 = scmp.ne.s32.totalorder %s73, %s75
      %p82 = scmp.eq.s32.totalorder %s23, 1
      %p83 = por %p81, %p82
      %p84 = scmp.ne.s32.totalorder %s75, %s76
      %p85 = scmp.eq.s32.totalorder %s23, 0
      %p86 = por %p84, %p85
      %p87 = scmp.ne.s32.totalorder %s75, %s76
      %p88 = scmp.eq.s32.totalorder %s24, 1
      %p89 = por %p87, %p88
      %p91 = scmp.ne.s32.totalorder %s76, %s90
      %p92 = scmp.eq.s32.totalorder %s24, 0
      %p93 = por %p91, %p92
      %s95 = sadd.s32 %s94, 1
      %p98 = scmp.eq.s32.totalorder %s18, 1
      %p99 = scmp.ne.s32.totalorder %s94, %s96
      %p100 = scmp.eq.s32.totalorder %s18, 0
      %p101 = por %p99, %p100
      %p102 = scmp.ne.s32.totalorder %s94, %s96
      %p103 = scmp.eq.s32.totalorder %s23, 1
      %p104 = por %p102, %p103
      %p105 = scmp.ne.s32.totalorder %s96, %s97
      %p106 = scmp.eq.s32.totalorder %s23, 0
      %p107 = por %p105, %p106
      %p108 = scmp.ne.s32.totalorder %s96, %s97
      %p109 = scmp.eq.s32.totalorder %s24, 1
      %p110 = por %p108, %p109
      %p112 = scmp.ne.s32.totalorder %s97, %s111
      %p113 = scmp.eq.s32.totalorder %s24, 0
      %p114 = por %p112, %p113
      %s116 = sadd.s32 %s115, 1
      %p119 = scmp.eq.s32.totalorder %s18, 1
      %p120 = scmp.ne.s32.totalorder %s115, %s117
      %p121 = scmp.eq.s32.totalorder %s18, 0
      %p122 = por %p120, %p121
      %p123 = scmp.ne.s32.totalorder %s115, %s117
      %p124 = scmp.eq.s32.totalorder %s23, 1
      %p125 = por %p123, %p124
      %p126 = scmp.ne.s32.totalorder %s117, %s118
      %p127 = scmp.eq.s32.totalorder %s23, 0
      %p128 = por %p126, %p127
      %p129 = scmp.ne.s32.totalorder %s117, %s118
      %p130 = scmp.eq.s32.totalorder %s24, 1
      %p131 = por %p129, %p130
      %p133 = scmp.ne.s32.totalorder %s118, %s132
      %p134 = scmp.eq.s32.totalorder %s24, 0
      %p135 = por %p133, %p134
      %s137 = sadd.s32 %s136, 1
      %p140 = scmp.eq.s32.totalorder %s18, 1
      %p141 = scmp.ne.s32.totalorder %s136, %s138
      %p142 = scmp.eq.s32.totalorder %s18, 0
      %p143 = por %p141, %p142
      %p144 = scmp.ne.s32.totalorder %s136, %s138
      %p145 = scmp.eq.s32.totalorder %s23, 1
      %p146 = por %p144, %p145
      %p147 = scmp.ne.s32.totalorder %s138, %s139
      %p148 = scmp.eq.s32.totalorder %s23, 0
      %p149 = por %p147, %p148
      %p150 = scmp.ne.s32.totalorder %s138, %s139
      %p151 = scmp.eq.s32.totalorder %s24, 1
      %p152 = por %p150, %p151
      %p154 = scmp.ne.s32.totalorder %s139, %s153
      %p155 = scmp.eq.s32.totalorder %s24, 0
      %p156 = por %p154, %p155
      %s158 = sadd.s32 %s157, 1
      %p161 = scmp.eq.s32.totalorder %s18, 1
      %p162 = scmp.ne.s32.totalorder %s157, %s159
      %p163 = scmp.eq.s32.totalorder %s18, 0
      %p164 = por %p162, %p163
      %p165 = scmp.ne.s32.totalorder %s157, %s159
      %p166 = scmp.eq.s32.totalorder %s23, 1
      %p167 = por %p165, %p166
      %p168 = scmp.ne.s32.totalorder %s159, %s160
      %p169 = scmp.eq.s32.totalorder %s23, 0
      %p170 = por %p168, %p169
      %p171 = scmp.ne.s32.totalorder %s159, %s160
      %p172 = scmp.eq.s32.totalorder %s24, 1
      %p173 = por %p171, %p172
      %p175 = scmp.ne.s32.totalorder %s160, %s174
      %p176 = scmp.eq.s32.totalorder %s24, 0
      %p177 = por %p175, %p176
      %s178 = ssub.s32 %s18, %s25
      %p179 = scmp.eq.s32.totalorder %s178, 0
      %s181 = sadd.s32 %s180, 1
      %s182 = scalar_select %p179, %s180, %s181
      %p185 = pneg %p179
      %p186 = scmp.eq.s32.totalorder %s18, 1
      %p187 = por %p185, %p186
      %p188 = scmp.ne.s32.totalorder %s180, %s183
      %p189 = scmp.eq.s32.totalorder %s18, 0
      %p190 = por %p188, %p189
      %p191 = scmp.ne.s32.totalorder %s180, %s183
      %p192 = scmp.eq.s32.totalorder %s23, 1
      %p193 = por %p191, %p192
      %p194 = scmp.ne.s32.totalorder %s183, %s184
      %p195 = scmp.eq.s32.totalorder %s23, 0
      %p196 = por %p194, %p195
      %p197 = scmp.ne.s32.totalorder %s183, %s184
      %p198 = scmp.eq.s32.totalorder %s24, 1
      %p199 = por %p197, %p198
      %p201 = scmp.ne.s32.totalorder %s184, %s200
      %p202 = scmp.eq.s32.totalorder %s24, 0
      %p203 = por %p201, %p202
      %p204 = scmp.le.s32.totalorder 1, %s18
      %p205 = scmp.lt.s32.totalorder %s18, 3
      %p206 = pnand %p204, %p205
      %p207 = pneg %p206
      // Predicated region
      $region9: #{tpu_custom_call.1} parent=5 // pred_check
        _
      $region10: #{tpu_custom_call.1} parent=5 // pred_check_branch
        %209 = sbr.rel (%p206) target = $region12
      $region11: #{tpu_custom_call.1} parent=5 // pred_region
        %s210 = ssub.s32 %s18, 1
        // Predicated region
        $region13: #{tpu_custom_call.1} parent=11 // pred_check
          %p211 = pneg %p65
        $region14: #{tpu_custom_call.1} parent=11 // pred_check_branch
          %213 = sbr.rel (%p211) target = $region16
        $region15: #{tpu_custom_call.1} parent=11 // pred_region
          _
        $region16: #{tpu_custom_call.1} parent=11 // pred_fallthru
          _
        // Predicated region
        $region17: #{tpu_custom_call.1} parent=11 // pred_check
          %p214 = pneg %p86
        $region18: #{tpu_custom_call.1} parent=11 // pred_check_branch
          %216 = sbr.rel (%p214) target = $region20
        $region19: #{tpu_custom_call.1} parent=11 // pred_region
          _
        $region20: #{tpu_custom_call.1} parent=11 // pred_fallthru
          _
        // Predicated region
        $region21: #{tpu_custom_call.1} parent=11 // pred_check
          %p217 = pneg %p107
        $region22: #{tpu_custom_call.1} parent=11 // pred_check_branch
          %219 = sbr.rel (%p217) target = $region24
        $region23: #{tpu_custom_call.1} parent=11 // pred_region
          %s221 = ssub.s32 1024, 1024
          %222 = vsyncadd [#allocation3], %s221
          %s223 = sshll.u32 [#allocation2], 4
          %s224 = int_to_ptr.vmem [resolvable:$true] %s223
          %229 = dma.hbm_to_vmem [thread:$0]  %s3, 1024, %s224, [#allocation3], 64, 64, 4
        $region24: #{tpu_custom_call.1} parent=11 // pred_fallthru
          _
        // Predicated region
        $region25: #{tpu_custom_call.1} parent=11 // pred_check
          %p230 = pneg %p128
        $region26: #{tpu_custom_call.1} parent=11 // pred_check_branch
          %232 = sbr.rel (%p230) target = $region28
        $region27: #{tpu_custom_call.1} parent=11 // pred_region
          _
        $region28: #{tpu_custom_call.1} parent=11 // pred_fallthru
          _
        // Predicated region
        $region29: #{tpu_custom_call.1} parent=11 // pred_check
          %p233 = pneg %p149
        $region30: #{tpu_custom_call.1} parent=11 // pred_check_branch
          %235 = sbr.rel (%p233) target = $region32
        $region31: #{tpu_custom_call.1} parent=11 // pred_region
          %s237 = ssub.s32 1024, 1024
          %238 = vsyncadd [#allocation6], %s237
          %s239 = sshll.u32 [#allocation5], 4
          %s240 = int_to_ptr.vmem [resolvable:$true] %s239
          %245 = dma.hbm_to_vmem [thread:$0]  %s5, 1024, %s240, [#allocation6], 64, 64, 4
        $region32: #{tpu_custom_call.1} parent=11 // pred_fallthru
          _
        // Predicated region
        $region33: #{tpu_custom_call.1} parent=11 // pred_check
          %p246 = pneg %p170
        $region34: #{tpu_custom_call.1} parent=11 // pred_check_branch
          %248 = sbr.rel (%p246) target = $region36
        $region35: #{tpu_custom_call.1} parent=11 // pred_region
          _
        $region36: #{tpu_custom_call.1} parent=11 // pred_fallthru
          _
      $region12: #{tpu_custom_call.1} parent=5 // pred_fallthru
        _
      %p249 = scmp.lt.s32.totalorder %s18, 2
      // Predicated region
      $region37: #{tpu_custom_call.1} parent=5 // pred_check
        %p250 = pneg %p249
      $region38: #{tpu_custom_call.1} parent=5 // pred_check_branch
        %252 = sbr.rel (%p250) target = $region40
      $region39: #{tpu_custom_call.1} parent=5 // pred_region
        // Predicated region
        $region41: #{tpu_custom_call.1} parent=39 // pred_check
          %p253 = pneg %p38
        $region42: #{tpu_custom_call.1} parent=39 // pred_check_branch
          %255 = sbr.rel (%p253) target = $region44
        $region43: #{tpu_custom_call.1} parent=39 // pred_region
          %p256 = scmp.lt.s32.totalorder %s18, 1
          %s257 = scalar_select %p256, %s18, 1
          %s258 = smul.addr %s257, 8
          %s259 = scalar_lea.vmem %s0, %s258
        $region44: #{tpu_custom_call.1} parent=39 // pred_fallthru
          _
      $region40: #{tpu_custom_call.1} parent=5 // pred_fallthru
        _
      %p260 = scmp.le.s32.totalorder 1, %s18
      %p261 = scmp.lt.s32.totalorder %s18, 3
      %p262 = pnand %p260, %p261
      %p263 = pneg %p262
      // Predicated region
      $region45: #{tpu_custom_call.1} parent=5 // pred_check
        _
      $region46: #{tpu_custom_call.1} parent=5 // pred_check_branch
        %265 = sbr.rel (%p262) target = $region48
      $region47: #{tpu_custom_call.1} parent=5 // pred_region
        %s266 = ssub.s32 %s18, 1
        // Predicated region
        $region49: #{tpu_custom_call.1} parent=47 // pred_check
          %p267 = pneg %p107
        $region50: #{tpu_custom_call.1} parent=47 // pred_check_branch
          %269 = sbr.rel (%p267) target = $region52
        $region51: #{tpu_custom_call.1} parent=47 // pred_region
          %270 = dma.done [#allocation3], 1024
        $region52: #{tpu_custom_call.1} parent=47 // pred_fallthru
          _
        // Predicated region
        $region53: #{tpu_custom_call.1} parent=47 // pred_check
          %p271 = pneg %p149
        $region54: #{tpu_custom_call.1} parent=47 // pred_check_branch
          %273 = sbr.rel (%p271) target = $region56
        $region55: #{tpu_custom_call.1} parent=47 // pred_region
          %274 = dma.done [#allocation6], 1024
        $region56: #{tpu_custom_call.1} parent=47 // pred_fallthru
          _
        %p275 = scmp.lt.s32.totalorder %s23, 1
        %s276 = scalar_select %p275, %s23, 1
        %s277 = smul.addr %s276, 8
        %s278 = scalar_lea.vmem %s0, %s277
        %p279 = pneg %p44
        %p280 = pneg %p41
        %p281 = pneg %p65
        %p282 = pneg %p62
        %p283 = pneg %p86
        %p284 = pneg %p83
        %p285 = pneg %p107
        %p286 = pneg %p104
        %p287 = pneg %p128
        %p288 = pneg %p125
        %p289 = pneg %p149
        %p290 = pneg %p146
        %p291 = pneg %p170
        %p292 = pneg %p167
        %p293 = pneg %p196
        %p294 = pneg %p193
        %s295 = sand.u32 %s183, 1
        %s296 = scalar_lea.sflag [#allocation4], %s295
        %s297 = sand.u32 %s183, 1
        %s298 = smul.addr %s297, 8
        %s299 = scalar_lea.vmem [#allocation7], %s298
        %p300 = scmp.lt.s32.totalorder %s23, 1
        %s301 = scalar_select %p300, %s23, 1
        %s302 = smul.addr %s301, 8
        %s303 = scalar_lea.vmem %s0, %s302
        %v305 = vld [vmem:[%s303] sm:$0xff]
        %v306 = vcvt.s32.f32 %v305
        %v307 = vld [vmem:[%s1] sm:$0x1]
        %309 = vset.pattern.permute.xlu0 0
        %310 = vperm.xlu0 %309, %v306
        %v311 = vpop.permute.xlu0 %310
        %v314 = vlaneseq
        %v315 = vshrl.u32 %v314, 7
        %v316 = vsub.s32 0, %v315
        %v317 = vrot.slane %v307, %v316
        %v319 = vmul.f32 %v311, %v317
        %v320 = vld [vmem:[%s2] sm:$0x1]
        %v322 = vlaneseq
        %v323 = vshrl.u32 %v322, 7
        %v324 = vsub.s32 0, %v323
        %v325 = vrot.slane %v320, %v324
        %v327 = vadd.f32 %v319, %v325
        %v328 = vand.u32 2147483647, %v327
        %vm329 = vcmp.le.f32.partialorder %v328, 0.7853982
        %vm330 = vcmp.lt.s32.totalorder %v327, 0
        %v331 = vand.u32 %v327, 2139095040
        %v332 = vshrl.u32 %v331, 23
        %v333 = vsub.s32 %v332, 127
        %v334 = vand.u32 2147483647, %v327
        %v335 = vand.u32 %v334, 8388607
        %v336 = vor.u32 %v335, 8388608
        %v337 = vsub.s32 0, %v336
        %v338 = vadd.s32 %v333, 1
        %vm339 = vcmp.gt.s32.totalorder %v338, 0
        %v340 = vsel %vm339, %v338, 0
        %v341 = vshrl.u32 %v340, 5
        %v342 = vand.u32 %v340, 31
        %v343 = vsub.s32 32, %v342
        %v344 = vshrl.u32 683565275, %v343
        %v345 = vshll.u32 683565275, %v342
        %v346 = vshrl.u32 2475754826, %v343
        %v347 = vor.u32 %v345, %v346
        %v348 = vshll.u32 2475754826, %v342
        %v349 = vshrl.u32 2131351028, %v343
        %v350 = vor.u32 %v348, %v349
        %v351 = vshll.u32 2131351028, %v342
        %v352 = vshrl.u32 2102212464, %v343
        %v353 = vor.u32 %v351, %v352
        %v354 = vshll.u32 2102212464, %v342
        %v355 = vshrl.u32 920167782, %v343
        %v356 = vor.u32 %v354, %v355
        %v357 = vshll.u32 920167782, %v342
        %v358 = vshrl.u32 1326507024, %v343
        %v359 = vor.u32 %v357, %v358
        %vm360 = vcmp.lt.s32.totalorder %v341, 1
        %vm361 = vcmp.lt.s32.totalorder %v341, 2
        %vm362 = vcmp.lt.s32.totalorder %v341, 3
        %vm363 = vcmp.lt.s32.totalorder %v341, 4
        %v364 = vsel %vm360, %v344, %v347
        %v365 = vsel %vm363, %v353, 2102212464
        %v366 = vsel %vm362, %v350, %v365
        %v367 = vsel %vm361, %v364, %v366
        %v368 = vsel %vm360, %v347, %v350
        %v369 = vsel %vm363, %v356, 920167782
        %v370 = vsel %vm362, %v353, %v369
        %v371 = vsel %vm361, %v368, %v370
        %v372 = vsel %vm360, %v350, %v353
        %v373 = vsel %vm363, %v359, 1326507024
        %v374 = vsel %vm362, %v356, %v373
        %v375 = vsel %vm361, %v372, %v374
        %v376 = vshll.u32 %v336, 8
        %v377 = vmul.u32.u64.compose %v376, %v375
        %v378 = vextract.low.u32 %v377
        %v379 = vextract.high.u32 %v377
        %v380 = vmul.u32.u64.compose %v376, %v371
        %v381 = vextract.low.u32 %v380
        %v382 = vextract.high.u32 %v380
        %v383 = vmul.u32 %v376, %v367
        %v384 = vadd.s32 %v379, %v381
        %vm385 = vc.u32 %v379, %v381
        %v386 = vadd.s32 %v382, 1
        %v387 = vsel %vm385, %v386, %v382
        %v388 = vadd.s32 %v383, %v387
        %v389 = vadd.s32 %v388, 536870912
        %v390 = vshrl.u32 %v389, 30
        %v391 = vshll.u32 %v390, 30
        %v392 = vsub.s32 %v388, %v391
        %vm393 = vcmp.lt.s32.totalorder %v392, 0
        %v394 = vsub.s32 0, %v392
        %v395 = vsel %vm393, %v394, %v392
        %v396 = vclz %v395
        %v397 = vsub.s32 %v396, 2
        %vm398 = vcmp.gt.s32.totalorder 0, %v397
        %v399 = vsel %vm398, 0, %v397
        %v400 = vsub.s32 32, %v399
        %v401 = vshll.u32 %v392, %v399
        %v402 = vshrl.u32 %v384, %v400
        %v403 = vor.u32 %v401, %v402
        %v404 = vsub.s32 4294967266, %v399
        %v405 = vadd.s32 %v404, 127
        %v406 = vshll.u32 %v405, 23
        %v407 = vor.u32 4788187, %v406
        %v408 = vand.u32 2147483647, %v407
        %v410 = vcvt.s32.f32 %v403
        %v411 = vmul.f32 %v410, %v408
        %v412 = vxor.u32 %v411, 2147483648
        %v413 = vsel %vm330, %v412, %v411
        %v414 = vsub.s32 4, %v390
        %v415 = vsel %vm330, %v414, %v390
        %v416 = vsel %vm329, %v327, %v413
        %v417 = vsel %vm329, 0, %v415
        %v418 = vcosq.f32.pop %v416
        %v419 = vsinq.f32.pop %v416
        %vm420 = vweird.f32 %v327
        %v421 = vadd.s32 %v417, 3
        %v422 = vand.u32 %v421, 3
        %vm423 = vcmp.lt.s32.totalorder %v422, 2
        %vm424 = vcmp.eq.s32.totalorder %v422, 0
        %v425 = vxor.u32 %v419, 2147483648
        %v426 = vsel %vm424, %v418, %v425
        %vm427 = vcmp.eq.s32.totalorder %v422, 2
        %v428 = vxor.u32 %v418, 2147483648
        %v429 = vsel %vm427, %v428, %v419
        %v430 = vsel %vm423, %v426, %v429
        %v431 = vsel %vm420, nan, %v430
        %v432 = vpack.c.bf16 %v431, %v431
        %v433 = vld [vmem:[#allocation2] sm:$0xf]
        %v434 = vld [vmem:[#allocation2 + $0x4] sm:$0xf]
        %v435 = vld [vmem:[#allocation2 + $0x8] sm:$0xf]
        %v436 = vld [vmem:[#allocation2 + $0xc] sm:$0xf]
        %v437 = vld [vmem:[#allocation2 + $0x10] sm:$0xf]
        %v438 = vld [vmem:[#allocation2 + $0x14] sm:$0xf]
        %v439 = vld [vmem:[#allocation2 + $0x18] sm:$0xf]
        %v440 = vld [vmem:[#allocation2 + $0x1c] sm:$0xf]
        %v441 = vld [vmem:[#allocation2 + $0x20] sm:$0xf]
        %v442 = vld [vmem:[#allocation2 + $0x24] sm:$0xf]
        %v443 = vld [vmem:[#allocation2 + $0x28] sm:$0xf]
        %v444 = vld [vmem:[#allocation2 + $0x2c] sm:$0xf]
        %v445 = vld [vmem:[#allocation2 + $0x30] sm:$0xf]
        %v446 = vld [vmem:[#allocation2 + $0x34] sm:$0xf]
        %v447 = vld [vmem:[#allocation2 + $0x38] sm:$0xf]
        %v448 = vld [vmem:[#allocation2 + $0x3c] sm:$0xf]
        %v449 = vld [vmem:[%s4] sm:$0x1]
        %v451 = vlaneseq
        %v452 = vshrl.u32 %v451, 7
        %v453 = vsub.s32 0, %v452
        %v454 = vrot.slane %v449, %v453
        %v472 = vunpack.c.l.b16 %v433
        %v473 = vunpack.c.l.b16 %v434
        %v474 = vunpack.c.l.b16 %v435
        %v475 = vunpack.c.l.b16 %v436
        %v476 = vunpack.c.l.b16 %v437
        %v477 = vunpack.c.l.b16 %v438
        %v478 = vunpack.c.l.b16 %v439
        %v479 = vunpack.c.l.b16 %v440
        %v480 = vunpack.c.l.b16 %v441
        %v481 = vunpack.c.l.b16 %v442
        %v482 = vunpack.c.l.b16 %v443
        %v483 = vunpack.c.l.b16 %v444
        %v484 = vunpack.c.l.b16 %v445
        %v485 = vunpack.c.l.b16 %v446
        %v486 = vunpack.c.l.b16 %v447
        %v487 = vunpack.c.l.b16 %v448
        %v488 = vpack.c.b16 %v473, %v472
        %v489 = vpack.c.b16 %v475, %v474
        %v490 = vpack.c.b16 %v477, %v476
        %v491 = vpack.c.b16 %v479, %v478
        %v492 = vpack.c.b16 %v481, %v480
        %v493 = vpack.c.b16 %v483, %v482
        %v494 = vpack.c.b16 %v485, %v484
        %v495 = vpack.c.b16 %v487, %v486
        %504 = vmatprep.subr.bf16.mxu0 0
        %505 = vmatpush1.bf16.msra.mxu0 %v488
        %506 = vmatprep.subr.bf16.mxu0 0
        %507 = vmatpush1.bf16.msra.mxu0 %v489
        %508 = vmatprep.subr.bf16.mxu0 0
        %509 = vmatpush1.bf16.msra.mxu0 %v490
        %510 = vmatprep.subr.bf16.mxu0 0
        %511 = vmatpush1.bf16.msra.mxu0 %v491
        %512 = vmatprep.subr.bf16.mxu0 0
        %513 = vmatpush1.bf16.msra.mxu0 %v492
        %514 = vmatprep.subr.bf16.mxu0 0
        %515 = vmatpush1.bf16.msra.mxu0 %v493
        %516 = vmatprep.subr.bf16.mxu0 0
        %517 = vmatpush1.bf16.msra.mxu0 %v494
        %518 = vmatprep.subr.bf16.mxu0 0
        %519 = vmatpush1.bf16.msra.mxu0 %v495
        %520 = vmatprep.subr.bf16.mxu0 0
        %521 = vmatpush1.bf16.msra.mxu0 0
        %522 = vmatprep.subr.bf16.mxu0 0
        %523 = vmatpush1.bf16.msra.mxu0 0
        %524 = vmatprep.subr.bf16.mxu0 0
        %525 = vmatpush1.bf16.msra.mxu0 0
        %526 = vmatprep.subr.bf16.mxu0 0
        %527 = vmatpush1.bf16.msra.mxu0 0
        %528 = vmatprep.subr.bf16.mxu0 0
        %529 = vmatpush1.bf16.msra.mxu0 0
        %530 = vmatprep.subr.bf16.mxu0 0
        %531 = vmatpush1.bf16.msra.mxu0 0
        %532 = vmatprep.subr.bf16.mxu0 0
        %533 = vmatpush1.bf16.msra.mxu0 0
        %534 = vmatprep.subr.bf16.mxu0 0
        %535 = vmatpush1.bf16.msra.mxu0 0
        %536 = vmatprep.mubr.bf16.mxu0 0
        %537 = vmatmul.mubr.bf16.gmra.mrb[0].mxu0 %v432
        %v538 = vpop.f32.mrb[0].mxu0
        %v539 = vadd.f32 %v454, %v538
        %v540 = vpop.f32.mrb[0].mxu0
        %v541 = vpop.f32.mrb[0].mxu0
        %v542 = vpop.f32.mrb[0].mxu0
        %543 = vdwg.mxu0
        %v544 = vxor.u32 %v539, 2147483648
        %v545 = vmul.f32 %v544, 1.442695
        %v546 = vpow.pop %v545
        %v547 = vadd.f32 %v546, 1.0
        %v548 = vrcp.pop %v547
        %v549 = vmul.f32 1.0, %v548
        %v550 = vmul.f32 %v539, %v549
        %v551 = vpack.c.bf16 %v550, %v550
        %v552 = vld [vmem:[#allocation5] sm:$0xf]
        %v553 = vld [vmem:[#allocation5 + $0x4] sm:$0xf]
        %v554 = vld [vmem:[#allocation5 + $0x8] sm:$0xf]
        %v555 = vld [vmem:[#allocation5 + $0xc] sm:$0xf]
        %v556 = vld [vmem:[#allocation5 + $0x10] sm:$0xf]
        %v557 = vld [vmem:[#allocation5 + $0x14] sm:$0xf]
        %v558 = vld [vmem:[#allocation5 + $0x18] sm:$0xf]
        %v559 = vld [vmem:[#allocation5 + $0x1c] sm:$0xf]
        %v560 = vld [vmem:[#allocation5 + $0x20] sm:$0xf]
        %v561 = vld [vmem:[#allocation5 + $0x24] sm:$0xf]
        %v562 = vld [vmem:[#allocation5 + $0x28] sm:$0xf]
        %v563 = vld [vmem:[#allocation5 + $0x2c] sm:$0xf]
        %v564 = vld [vmem:[#allocation5 + $0x30] sm:$0xf]
        %v565 = vld [vmem:[#allocation5 + $0x34] sm:$0xf]
        %v566 = vld [vmem:[#allocation5 + $0x38] sm:$0xf]
        %v567 = vld [vmem:[#allocation5 + $0x3c] sm:$0xf]
        %v568 = vld [vmem:[%s6] sm:$0x1]
        %v570 = vlaneseq
        %v571 = vshrl.u32 %v570, 7
        %v572 = vsub.s32 0, %v571
        %v573 = vrot.slane %v568, %v572
        %v591 = vunpack.c.l.b16 %v552
        %v592 = vunpack.c.l.b16 %v553
        %v593 = vunpack.c.l.b16 %v554
        %v594 = vunpack.c.l.b16 %v555
        %v595 = vunpack.c.l.b16 %v556
        %v596 = vunpack.c.l.b16 %v557
        %v597 = vunpack.c.l.b16 %v558
        %v598 = vunpack.c.l.b16 %v559
        %v599 = vunpack.c.l.b16 %v560
        %v600 = vunpack.c.l.b16 %v561
        %v601 = vunpack.c.l.b16 %v562
        %v602 = vunpack.c.l.b16 %v563
        %v603 = vunpack.c.l.b16 %v564
        %v604 = vunpack.c.l.b16 %v565
        %v605 = vunpack.c.l.b16 %v566
        %v606 = vunpack.c.l.b16 %v567
        %v607 = vpack.c.b16 %v592, %v591
        %v608 = vpack.c.b16 %v594, %v593
        %v609 = vpack.c.b16 %v596, %v595
        %v610 = vpack.c.b16 %v598, %v597
        %v611 = vpack.c.b16 %v600, %v599
        %v612 = vpack.c.b16 %v602, %v601
        %v613 = vpack.c.b16 %v604, %v603
        %v614 = vpack.c.b16 %v606, %v605
        %623 = vmatprep.subr.bf16.mxu0 0
        %624 = vmatpush1.bf16.msra.mxu0 %v607
        %625 = vmatprep.subr.bf16.mxu0 0
        %626 = vmatpush1.bf16.msra.mxu0 %v608
        %627 = vmatprep.subr.bf16.mxu0 0
        %628 = vmatpush1.bf16.msra.mxu0 %v609
        %629 = vmatprep.subr.bf16.mxu0 0
        %630 = vmatpush1.bf16.msra.mxu0 %v610
        %631 = vmatprep.subr.bf16.mxu0 0
        %632 = vmatpush1.bf16.msra.mxu0 %v611
        %633 = vmatprep.subr.bf16.mxu0 0
        %634 = vmatpush1.bf16.msra.mxu0 %v612
        %635 = vmatprep.subr.bf16.mxu0 0
        %636 = vmatpush1.bf16.msra.mxu0 %v613
        %637 = vmatprep.subr.bf16.mxu0 0
        %638 = vmatpush1.bf16.msra.mxu0 %v614
        %639 = vmatprep.subr.bf16.mxu0 0
        %640 = vmatpush1.bf16.msra.mxu0 0
        %641 = vmatprep.subr.bf16.mxu0 0
        %642 = vmatpush1.bf16.msra.mxu0 0
        %643 = vmatprep.subr.bf16.mxu0 0
        %644 = vmatpush1.bf16.msra.mxu0 0
        %645 = vmatprep.subr.bf16.mxu0 0
        %646 = vmatpush1.bf16.msra.mxu0 0
        %647 = vmatprep.subr.bf16.mxu0 0
        %648 = vmatpush1.bf16.msra.mxu0 0
        %649 = vmatprep.subr.bf16.mxu0 0
        %650 = vmatpush1.bf16.msra.mxu0 0
        %651 = vmatprep.subr.bf16.mxu0 0
        %652 = vmatpush1.bf16.msra.mxu0 0
        %653 = vmatprep.subr.bf16.mxu0 0
        %654 = vmatpush1.bf16.msra.mxu0 0
        %655 = vmatprep.mubr.bf16.mxu0 0
        %656 = vmatmul.mubr.bf16.gmra.mrb[0].mxu0 %v551
        %v657 = vpop.f32.mrb[0].mxu0
        %v658 = vadd.f32 %v573, %v657
        %v659 = vpop.f32.mrb[0].mxu0
        %v660 = vpop.f32.mrb[0].mxu0
        %v661 = vpop.f32.mrb[0].mxu0
        %662 = vdwg.mxu0
        %663 = vst [vmem:[%s299] sm:$0xff] %v658
        %s664 = sand.u32 %s183, 1
        %s665 = scalar_lea.sflag [#allocation4], %s664
        %s666 = sand.u32 %s183, 1
        %s667 = smul.addr %s666, 8
        %s668 = scalar_lea.vmem [#allocation7], %s667
        // Predicated region
        $region57: #{tpu_custom_call.1} parent=47 // pred_check
          %p669 = pneg %p193
        $region58: #{tpu_custom_call.1} parent=47 // pred_check_branch
          %671 = sbr.rel (%p669) target = $region60
        $region59: #{tpu_custom_call.1} parent=47 // pred_region
          %s673 = ssub.s32 128, 128
          %674 = vsyncadd %s665, %s673
          %s675 = smul.addr %s23, 128
          %s676 = scalar_lea.hbm %s7, %s675
          %s678 = sshll.u32 %s668, 4
          %s679 = int_to_ptr.vmem [resolvable:$true] %s678
          %681 = dma.vmem_to_hbm [thread:$0]  %s679, 128, %s676, %s665
        $region60: #{tpu_custom_call.1} parent=47 // pred_fallthru
          _
      $region48: #{tpu_custom_call.1} parent=5 // pred_fallthru
        _
      %p682 = scmp.le.s32.totalorder 2, %s18
      // Predicated region
      $region61: #{tpu_custom_call.1} parent=5 // pred_check
        %p683 = pneg %p682
      $region62: #{tpu_custom_call.1} parent=5 // pred_check_branch
        %685 = sbr.rel (%p683) target = $region64
      $region63: #{tpu_custom_call.1} parent=5 // pred_region
        %s686 = ssub.s32 %s18, 2
        // Predicated region
        $region65: #{tpu_custom_call.1} parent=63 // pred_check
          %p687 = pneg %p199
        $region66: #{tpu_custom_call.1} parent=63 // pred_check_branch
          %689 = sbr.rel (%p687) target = $region68
        $region67: #{tpu_custom_call.1} parent=63 // pred_region
          %s690 = sand.u32 %s184, 1
          %s691 = scalar_lea.sflag [#allocation4], %s690
          %s692 = sand.u32 %s184, 1
          %s693 = smul.addr %s692, 8
          %s694 = scalar_lea.vmem [#allocation7], %s693
          %695 = dma.done %s691, 128
        $region68: #{tpu_custom_call.1} parent=63 // pred_fallthru
          _
      $region64: #{tpu_custom_call.1} parent=5 // pred_fallthru
        _
    $region6: #{tpu_custom_call.1} parent=1 // loop_footer
      %s22 = sadd.s32 1, %s18
    $region7: #{tpu_custom_call.1} parent=1 // loop_footer_branch
      %17 = sbr.rel target = $region3
    $region8: #{tpu_custom_call.1} parent=1 // loop_exit
      _
    %696 = vsyncpa [#allocation3], 1
    %s697 = scalar_lea.sflag [#allocation3], 1
    %698 = vsyncpa %s697, 1
    %699 = vsyncpa [#allocation6], 1
    %700 = vsyncpa [#allocation4], 1
    %s701 = scalar_lea.sflag [#allocation4], 1
    %702 = vsyncpa %s701, 1

// kernel: tpu_custom_call.1
$region0: #{tpu_custom_call.1}
  #allocation0 [shape = 'u32[]', space=smem, size = 0x4, offset = 0x4, fixed_abs, tag = 'smem constant byte address 0x4 - core index']
  #allocation1 [shape = 'u32[144,128]{1,0:T(1,128)}', space=vmem, size = 0x12000, scoped, tag = 'internal scratch']
  %s0 = inlined_call_operand.vmem [shape: s32[16,1], index: 0, kind: input, shape index: {}]
  %s1 = inlined_call_operand.vmem [shape: f32[1,128], index: 1, kind: input, shape index: {}]
  %s2 = inlined_call_operand.vmem [shape: f32[1,128], index: 2, kind: input, shape index: {}]
  %s3 = inlined_call_operand.hbm [shape: bf16[128,128], index: 3, kind: input, shape index: {}]
  %s4 = inlined_call_operand.vmem [shape: f32[1,128], index: 4, kind: input, shape index: {}]
  %s5 = inlined_call_operand.hbm [shape: bf16[128,128], index: 5, kind: input, shape index: {}]
  %s6 = inlined_call_operand.vmem [shape: f32[1,128], index: 6, kind: input, shape index: {}]
  %s7 = inlined_call_operand.hbm [shape: f32[16,128], index: 7, kind: output, shape index: {}]
  %s8 = sld [smem:[#allocation0]]
  $region69: #{tpu_custom_call.1} parent=0
    _
  %s10 = ssub.s32 1, %s8
  %s11 = scalar_select 0, %s10, %s8
  $region1: #{tpu_custom_call.1} parent=0
    #allocation2 [shape = 'u8[32768]{0}', space=vmem, size = 0x8000, scoped, tag = 'input window, operand 3, single buffered']
    #allocation3 [shape = 's32[2]{0}', space=sflag, size = 0x8, scoped, tag = 'scoped memory for tpu_custom_call.1']
    #allocation4 [shape = 's32[2]{0}', space=sflag, size = 0x8, scoped, tag = 'scoped memory for tpu_custom_call.1']
    #allocation5 [shape = 'u8[32768]{0}', space=vmem, size = 0x8000, scoped, tag = 'input window, operand 5, single buffered']
    #allocation6 [shape = 's32[1]{0}', space=sflag, size = 0x4, scoped, tag = 'scoped memory for tpu_custom_call.1']
    #allocation7 [shape = 'u8[8192]{0}', space=vmem, size = 0x2000, scoped, tag = 'output window, operand 0']
    %12 = vsyncpa [#allocation3], 0
    %13 = vsyncpa [#allocation6], 0
    %14 = vsyncpa [#allocation4], 0
    %s15 = scalar_lea.sflag [#allocation4], 1
    %16 = vsyncpa %s15, 0
    loop: start=0, step=1, limit=4
    $region2: #{tpu_custom_call.1} parent=1 // loop_pre_header
      _
    $region3: #{tpu_custom_call.1} parent=1 // loop_header
      %s18 = sphi 0, %s22
      %p19 = scmp.ge.s32.totalorder %s18, 4
      %s28 = sphi 0, %s30
      %s31 = sphi 0, %s28
      %s32 = sphi 0, %s31
      %s48 = sphi 0, %s32
      %s52 = sphi 0, %s52
      %s54 = sphi 0, %s52
      %s55 = sphi 0, %s54
      %s69 = sphi 0, %s55
      %s73 = sphi 0, %s73
      %s75 = sphi 0, %s73
      %s76 = sphi 0, %s75
      %s90 = sphi 0, %s76
      %s94 = sphi 0, %s94
      %s96 = sphi 0, %s94
      %s97 = sphi 0, %s96
      %s111 = sphi 0, %s97
      %s115 = sphi 0, %s115
      %s117 = sphi 0, %s115
      %s118 = sphi 0, %s117
      %s132 = sphi 0, %s118
      %s136 = sphi 0, %s136
      %s138 = sphi 0, %s136
      %s139 = sphi 0, %s138
      %s153 = sphi 0, %s139
      %s157 = sphi 0, %s157
      %s159 = sphi 0, %s157
      %s160 = sphi 0, %s159
      %s174 = sphi 0, %s160
      %s180 = sphi 0, %s182
      %s183 = sphi 0, %s180
      %s184 = sphi 0, %s183
      %s200 = sphi 0, %s184
    $region4: #{tpu_custom_call.1} parent=1 // loop_header_branch
      %21 = sbr.rel (%p19) target = $region8
    $region5: #{tpu_custom_call.1} parent=1 // loop_body
      %s23 = ssub.s32 %s18, 1
      %s24 = ssub.s32 %s18, 2
      %s25 = sadd.s32 %s18, 1
      %s26 = ssub.s32 %s18, %s25
      %p27 = scmp.eq.s32.totalorder %s26, 0
      %s29 = sadd.s32 %s28, 1
      %s30 = scalar_select %p27, %s28, %s29
      %p33 = pneg %p27
      %p34 = scmp.eq.s32.totalorder %s18, 1
      %p35 = por %p33, %p34
      %p36 = scmp.ne.s32.totalorder %s28, %s31
      %p37 = scmp.eq.s32.totalorder %s18, 0
      %p38 = por %p36, %p37
      %p39 = scmp.ne.s32.totalorder %s28, %s31
      %p40 = scmp.eq.s32.totalorder %s23, 1
      %p41 = por %p39, %p40
      %p42 = scmp.ne.s32.totalorder %s31, %s32
      %p43 = scmp.eq.s32.totalorder %s23, 0
      %p44 = por %p42, %p43
      %p45 = scmp.ne.s32.totalorder %s31, %s32
      %p46 = scmp.eq.s32.totalorder %s24, 1
      %p47 = por %p45, %p46
      %p49 = scmp.ne.s32.totalorder %s32, %s48
      %p50 = scmp.eq.s32.totalorder %s24, 0
      %p51 = por %p49, %p50
      %s53 = sadd.s32 %s52, 1
      %p56 = scmp.eq.s32.totalorder %s18, 1
      %p57 = scmp.ne.s32.totalorder %s52, %s54
      %p58 = scmp.eq.s32.totalorder %s18, 0
      %p59 = por %p57, %p58
      %p60 = scmp.ne.s32.totalorder %s52, %s54
      %p61 = scmp.eq.s32.totalorder %s23, 1
      %p62 = por %p60, %p61
      %p63 = scmp.ne.s32.totalorder %s54, %s55
      %p64 = scmp.eq.s32.totalorder %s23, 0
      %p65 = por %p63, %p64
      %p66 = scmp.ne.s32.totalorder %s54, %s55
      %p67 = scmp.eq.s32.totalorder %s24, 1
      %p68 = por %p66, %p67
      %p70 = scmp.ne.s32.totalorder %s55, %s69
      %p71 = scmp.eq.s32.totalorder %s24, 0
      %p72 = por %p70, %p71
      %s74 = sadd.s32 %s73, 1
      %p77 = scmp.eq.s32.totalorder %s18, 1
      %p78 = scmp.ne.s32.totalorder %s73, %s75
      %p79 = scmp.eq.s32.totalorder %s18, 0
      %p80 = por %p78, %p79
      %p81 = scmp.ne.s32.totalorder %s73, %s75
      %p82 = scmp.eq.s32.totalorder %s23, 1
      %p83 = por %p81, %p82
      %p84 = scmp.ne.s32.totalorder %s75, %s76
      %p85 = scmp.eq.s32.totalorder %s23, 0
      %p86 = por %p84, %p85
      %p87 = scmp.ne.s32.totalorder %s75, %s76
      %p88 = scmp.eq.s32.totalorder %s24, 1
      %p89 = por %p87, %p88
      %p91 = scmp.ne.s32.totalorder %s76, %s90
      %p92 = scmp.eq.s32.totalorder %s24, 0
      %p93 = por %p91, %p92
      %s95 = sadd.s32 %s94, 1
      %p98 = scmp.eq.s32.totalorder %s18, 1
      %p99 = scmp.ne.s32.totalorder %s94, %s96
      %p100 = scmp.eq.s32.totalorder %s18, 0
      %p101 = por %p99, %p100
      %p102 = scmp.ne.s32.totalorder %s94, %s96
      %p103 = scmp.eq.s32.totalorder %s23, 1
      %p104 = por %p102, %p103
      %p105 = scmp.ne.s32.totalorder %s96, %s97
      %p106 = scmp.eq.s32.totalorder %s23, 0
      %p107 = por %p105, %p106
      %p108 = scmp.ne.s32.totalorder %s96, %s97
      %p109 = scmp.eq.s32.totalorder %s24, 1
      %p110 = por %p108, %p109
      %p112 = scmp.ne.s32.totalorder %s97, %s111
      %p113 = scmp.eq.s32.totalorder %s24, 0
      %p114 = por %p112, %p113
      %s116 = sadd.s32 %s115, 1
      %p119 = scmp.eq.s32.totalorder %s18, 1
      %p120 = scmp.ne.s32.totalorder %s115, %s117
      %p121 = scmp.eq.s32.totalorder %s18, 0
      %p122 = por %p120, %p121
      %p123 = scmp.ne.s32.totalorder %s115, %s117
      %p124 = scmp.eq.s32.totalorder %s23, 1
      %p125 = por %p123, %p124
      %p126 = scmp.ne.s32.totalorder %s117, %s118
      %p127 = scmp.eq.s32.totalorder %s23, 0
      %p128 = por %p126, %p127
      %p129 = scmp.ne.s32.totalorder %s117, %s118
      %p130 = scmp.eq.s32.totalorder %s24, 1
      %p131 = por %p129, %p130
      %p133 = scmp.ne.s32.totalorder %s118, %s132
      %p134 = scmp.eq.s32.totalorder %s24, 0
      %p135 = por %p133, %p134
      %s137 = sadd.s32 %s136, 1
      %p140 = scmp.eq.s32.totalorder %s18, 1
      %p141 = scmp.ne.s32.totalorder %s136, %s138
      %p142 = scmp.eq.s32.totalorder %s18, 0
      %p143 = por %p141, %p142
      %p144 = scmp.ne.s32.totalorder %s136, %s138
      %p145 = scmp.eq.s32.totalorder %s23, 1
      %p146 = por %p144, %p145
      %p147 = scmp.ne.s32.totalorder %s138, %s139
      %p148 = scmp.eq.s32.totalorder %s23, 0
      %p149 = por %p147, %p148
      %p150 = scmp.ne.s32.totalorder %s138, %s139
      %p151 = scmp.eq.s32.totalorder %s24, 1
      %p152 = por %p150, %p151
      %p154 = scmp.ne.s32.totalorder %s139, %s153
      %p155 = scmp.eq.s32.totalorder %s24, 0
      %p156 = por %p154, %p155
      %s158 = sadd.s32 %s157, 1
      %p161 = scmp.eq.s32.totalorder %s18, 1
      %p162 = scmp.ne.s32.totalorder %s157, %s159
      %p163 = scmp.eq.s32.totalorder %s18, 0
      %p164 = por %p162, %p163
      %p165 = scmp.ne.s32.totalorder %s157, %s159
      %p166 = scmp.eq.s32.totalorder %s23, 1
      %p167 = por %p165, %p166
      %p168 = scmp.ne.s32.totalorder %s159, %s160
      %p169 = scmp.eq.s32.totalorder %s23, 0
      %p170 = por %p168, %p169
      %p171 = scmp.ne.s32.totalorder %s159, %s160
      %p172 = scmp.eq.s32.totalorder %s24, 1
      %p173 = por %p171, %p172
      %p175 = scmp.ne.s32.totalorder %s160, %s174
      %p176 = scmp.eq.s32.totalorder %s24, 0
      %p177 = por %p175, %p176
      %s178 = ssub.s32 %s18, %s25
      %p179 = scmp.eq.s32.totalorder %s178, 0
      %s181 = sadd.s32 %s180, 1
      %s182 = scalar_select %p179, %s180, %s181
      %p185 = pneg %p179
      %p186 = scmp.eq.s32.totalorder %s18, 1
      %p187 = por %p185, %p186
      %p188 = scmp.ne.s32.totalorder %s180, %s183
      %p189 = scmp.eq.s32.totalorder %s18, 0
      %p190 = por %p188, %p189
      %p191 = scmp.ne.s32.totalorder %s180, %s183
      %p192 = scmp.eq.s32.totalorder %s23, 1
      %p193 = por %p191, %p192
      %p194 = scmp.ne.s32.totalorder %s183, %s184
      %p195 = scmp.eq.s32.totalorder %s23, 0
      %p196 = por %p194, %p195
      %p197 = scmp.ne.s32.totalorder %s183, %s184
      %p198 = scmp.eq.s32.totalorder %s24, 1
      %p199 = por %p197, %p198
      %p201 = scmp.ne.s32.totalorder %s184, %s200
      %p202 = scmp.eq.s32.totalorder %s24, 0
      %p203 = por %p201, %p202
      %p204 = scmp.le.s32.totalorder 1, %s18
      %p205 = scmp.lt.s32.totalorder %s18, 3
      %p206 = pnand %p204, %p205
      %p207 = pneg %p206
      // Predicated region
      $region9: #{tpu_custom_call.1} parent=5 // pred_check
        _
      $region10: #{tpu_custom_call.1} parent=5 // pred_check_branch
        %209 = sbr.rel (%p206) target = $region12
      $region11: #{tpu_custom_call.1} parent=5 // pred_region
        %s210 = ssub.s32 %s18, 1
        // Predicated region
        $region13: #{tpu_custom_call.1} parent=11 // pred_check
          %p211 = pneg %p65
        $region14: #{tpu_custom_call.1} parent=11 // pred_check_branch
          %213 = sbr.rel (%p211) target = $region16
        $region15: #{tpu_custom_call.1} parent=11 // pred_region
          _
        $region16: #{tpu_custom_call.1} parent=11 // pred_fallthru
          _
        // Predicated region
        $region17: #{tpu_custom_call.1} parent=11 // pred_check
          %p214 = pneg %p86
        $region18: #{tpu_custom_call.1} parent=11 // pred_check_branch
          %216 = sbr.rel (%p214) target = $region20
        $region19: #{tpu_custom_call.1} parent=11 // pred_region
          _
        $region20: #{tpu_custom_call.1} parent=11 // pred_fallthru
          _
        // Predicated region
        $region21: #{tpu_custom_call.1} parent=11 // pred_check
          %p217 = pneg %p107
        $region22: #{tpu_custom_call.1} parent=11 // pred_check_branch
          %219 = sbr.rel (%p217) target = $region24
        $region23: #{tpu_custom_call.1} parent=11 // pred_region
          %s221 = ssub.s32 1024, 1024
          %222 = vsyncadd [#allocation3], %s221
          %s223 = sshll.u32 [#allocation2], 4
          %s224 = int_to_ptr.vmem [resolvable:$true] %s223
          %229 = dma.hbm_to_vmem [thread:$0]  %s3, 1024, %s224, [#allocation3], 64, 64, 4
        $region24: #{tpu_custom_call.1} parent=11 // pred_fallthru
          _
        // Predicated region
        $region25: #{tpu_custom_call.1} parent=11 // pred_check
          %p230 = pneg %p128
        $region26: #{tpu_custom_call.1} parent=11 // pred_check_branch
          %232 = sbr.rel (%p230) target = $region28
        $region27: #{tpu_custom_call.1} parent=11 // pred_region
          _
        $region28: #{tpu_custom_call.1} parent=11 // pred_fallthru
          _
        // Predicated region
        $region29: #{tpu_custom_call.1} parent=11 // pred_check
          %p233 = pneg %p149
        $region30: #{tpu_custom_call.1} parent=11 // pred_check_branch
          %235 = sbr.rel (%p233) target = $region32
        $region31: #{tpu_custom_call.1} parent=11 // pred_region
          %s237 = ssub.s32 1024, 1024
          %238 = vsyncadd [#allocation6], %s237
          %s239 = sshll.u32 [#allocation5], 4
          %s240 = int_to_ptr.vmem [resolvable:$true] %s239
          %245 = dma.hbm_to_vmem [thread:$0]  %s5, 1024, %s240, [#allocation6], 64, 64, 4
        $region32: #{tpu_custom_call.1} parent=11 // pred_fallthru
          _
        // Predicated region
        $region33: #{tpu_custom_call.1} parent=11 // pred_check
          %p246 = pneg %p170
        $region34: #{tpu_custom_call.1} parent=11 // pred_check_branch
          %248 = sbr.rel (%p246) target = $region36
        $region35: #{tpu_custom_call.1} parent=11 // pred_region
          _
        $region36: #{tpu_custom_call.1} parent=11 // pred_fallthru
          _
      $region12: #{tpu_custom_call.1} parent=5 // pred_fallthru
        _
      %p249 = scmp.lt.s32.totalorder %s18, 2
      // Predicated region
      $region37: #{tpu_custom_call.1} parent=5 // pred_check
        %p250 = pneg %p249
      $region38: #{tpu_custom_call.1} parent=5 // pred_check_branch
        %252 = sbr.rel (%p250) target = $region40
      $region39: #{tpu_custom_call.1} parent=5 // pred_region
        // Predicated region
        $region41: #{tpu_custom_call.1} parent=39 // pred_check
          %p253 = pneg %p38
        $region42: #{tpu_custom_call.1} parent=39 // pred_check_branch
          %255 = sbr.rel (%p253) target = $region44
        $region43: #{tpu_custom_call.1} parent=39 // pred_region
          %p256 = scmp.lt.s32.totalorder %s18, 1
          %s257 = scalar_select %p256, %s18, 1
          %s258 = smul.addr %s257, 8
          %s259 = scalar_lea.vmem %s0, %s258
        $region44: #{tpu_custom_call.1} parent=39 // pred_fallthru
          _
      $region40: #{tpu_custom_call.1} parent=5 // pred_fallthru
        _
      %p260 = scmp.le.s32.totalorder 1, %s18
      %p261 = scmp.lt.s32.totalorder %s18, 3
      %p262 = pnand %p260, %p261
      %p263 = pneg %p262
      // Predicated region
      $region45: #{tpu_custom_call.1} parent=5 // pred_check
        _
      $region46: #{tpu_custom_call.1} parent=5 // pred_check_branch
        %265 = sbr.rel (%p262) target = $region48
      $region47: #{tpu_custom_call.1} parent=5 // pred_region
        %s266 = ssub.s32 %s18, 1
        // Predicated region
        $region49: #{tpu_custom_call.1} parent=47 // pred_check
          %p267 = pneg %p107
        $region50: #{tpu_custom_call.1} parent=47 // pred_check_branch
          %269 = sbr.rel (%p267) target = $region52
        $region51: #{tpu_custom_call.1} parent=47 // pred_region
          %270 = dma.done [#allocation3], 1024
        $region52: #{tpu_custom_call.1} parent=47 // pred_fallthru
          _
        // Predicated region
        $region53: #{tpu_custom_call.1} parent=47 // pred_check
          %p271 = pneg %p149
        $region54: #{tpu_custom_call.1} parent=47 // pred_check_branch
          %273 = sbr.rel (%p271) target = $region56
        $region55: #{tpu_custom_call.1} parent=47 // pred_region
          %274 = dma.done [#allocation6], 1024
        $region56: #{tpu_custom_call.1} parent=47 // pred_fallthru
          _
        %p275 = scmp.lt.s32.totalorder %s23, 1
        %s276 = scalar_select %p275, %s23, 1
        %s277 = smul.addr %s276, 8
        %s278 = scalar_lea.vmem %s0, %s277
        %p279 = pneg %p44
        %p280 = pneg %p41
        %p281 = pneg %p65
        %p282 = pneg %p62
        %p283 = pneg %p86
        %p284 = pneg %p83
        %p285 = pneg %p107
        %p286 = pneg %p104
        %p287 = pneg %p128
        %p288 = pneg %p125
        %p289 = pneg %p149
        %p290 = pneg %p146
        %p291 = pneg %p170
        %p292 = pneg %p167
        %p293 = pneg %p196
        %p294 = pneg %p193
        %s295 = sand.u32 %s183, 1
        %s296 = scalar_lea.sflag [#allocation4], %s295
        %s297 = sand.u32 %s183, 1
        %s298 = smul.addr %s297, 8
        %s299 = scalar_lea.vmem [#allocation7], %s298
        %p300 = scmp.lt.s32.totalorder %s23, 1
        %s301 = scalar_select %p300, %s23, 1
        %s302 = smul.addr %s301, 8
        %s303 = scalar_lea.vmem %s0, %s302
        %v305 = vld [vmem:[%s303] sm:$0xff]
        %v306 = vcvt.s32.f32 %v305
        %v307 = vld [vmem:[%s1] sm:$0x1]
        %309 = vset.pattern.permute.xlu0 0
        %310 = vperm.xlu0 %309, %v306
        %v311 = vpop.permute.xlu0 %310
        %v314 = vlaneseq
        %v315 = vshrl.u32 %v314, 7
        %v316 = vsub.s32 0, %v315
        %v317 = vrot.slane %v307, %v316
        %v319 = vmul.f32 %v311, %v317
        %v320 = vld [vmem:[%s2] sm:$0x1]
        %v322 = vlaneseq
        %v323 = vshrl.u32 %v322, 7
        %v324 = vsub.s32 0, %v323
        %v325 = vrot.slane %v320, %v324
        %v327 = vadd.f32 %v319, %v325
        %v328 = vand.u32 2147483647, %v327
        %vm329 = vcmp.le.f32.partialorder %v328, 0.7853982
        %vm330 = vcmp.lt.s32.totalorder %v327, 0
        %v331 = vand.u32 %v327, 2139095040
        %v332 = vshrl.u32 %v331, 23
        %v333 = vsub.s32 %v332, 127
        %v334 = vand.u32 2147483647, %v327
        %v335 = vand.u32 %v334, 8388607
        %v336 = vor.u32 %v335, 8388608
        %v337 = vsub.s32 0, %v336
        %v338 = vadd.s32 %v333, 1
        %vm339 = vcmp.gt.s32.totalorder %v338, 0
        %v340 = vsel %vm339, %v338, 0
        %v341 = vshrl.u32 %v340, 5
        %v342 = vand.u32 %v340, 31
        %v343 = vsub.s32 32, %v342
        %v344 = vshrl.u32 683565275, %v343
        %v345 = vshll.u32 683565275, %v342
        %v346 = vshrl.u32 2475754826, %v343
        %v347 = vor.u32 %v345, %v346
        %v348 = vshll.u32 2475754826, %v342
        %v349 = vshrl.u32 2131351028, %v343
        %v350 = vor.u32 %v348, %v349
        %v351 = vshll.u32 2131351028, %v342
        %v352 = vshrl.u32 2102212464, %v343
        %v353 = vor.u32 %v351, %v352
        %v354 = vshll.u32 2102212464, %v342
        %v355 = vshrl.u32 920167782, %v343
        %v356 = vor.u32 %v354, %v355
        %v357 = vshll.u32 920167782, %v342
        %v358 = vshrl.u32 1326507024, %v343
        %v359 = vor.u32 %v357, %v358
        %vm360 = vcmp.lt.s32.totalorder %v341, 1
        %vm361 = vcmp.lt.s32.totalorder %v341, 2
        %vm362 = vcmp.lt.s32.totalorder %v341, 3
        %vm363 = vcmp.lt.s32.totalorder %v341, 4
        %v364 = vsel %vm360, %v344, %v347
        %v365 = vsel %vm363, %v353, 2102212464
        %v366 = vsel %vm362, %v350, %v365
        %v367 = vsel %vm361, %v364, %v366
        %v368 = vsel %vm360, %v347, %v350
        %v369 = vsel %vm363, %v356, 920167782
        %v370 = vsel %vm362, %v353, %v369
        %v371 = vsel %vm361, %v368, %v370
        %v372 = vsel %vm360, %v350, %v353
        %v373 = vsel %vm363, %v359, 1326507024
        %v374 = vsel %vm362, %v356, %v373
        %v375 = vsel %vm361, %v372, %v374
        %v376 = vshll.u32 %v336, 8
        %v377 = vmul.u32.u64.compose %v376, %v375
        %v378 = vextract.low.u32 %v377
        %v379 = vextract.high.u32 %v377
        %v380 = vmul.u32.u64.compose %v376, %v371
        %v381 = vextract.low.u32 %v380
        %v382 = vextract.high.u32 %v380
        %v383 = vmul.u32 %v376, %v367
        %v384 = vadd.s32 %v379, %v381
        %vm385 = vc.u32 %v379, %v381
        %v386 = vadd.s32 %v382, 1
        %v387 = vsel %vm385, %v386, %v382
        %v388 = vadd.s32 %v383, %v387
        %v389 = vadd.s32 %v388, 536870912
        %v390 = vshrl.u32 %v389, 30
        %v391 = vshll.u32 %v390, 30
        %v392 = vsub.s32 %v388, %v391
        %vm393 = vcmp.lt.s32.totalorder %v392, 0
        %v394 = vsub.s32 0, %v392
        %v395 = vsel %vm393, %v394, %v392
        %v396 = vclz %v395
        %v397 = vsub.s32 %v396, 2
        %vm398 = vcmp.gt.s32.totalorder 0, %v397
        %v399 = vsel %vm398, 0, %v397
        %v400 = vsub.s32 32, %v399
        %v401 = vshll.u32 %v392, %v399
        %v402 = vshrl.u32 %v384, %v400
        %v403 = vor.u32 %v401, %v402
        %v404 = vsub.s32 4294967266, %v399
        %v405 = vadd.s32 %v404, 127
        %v406 = vshll.u32 %v405, 23
        %v407 = vor.u32 4788187, %v406
        %v408 = vand.u32 2147483647, %v407
        %v410 = vcvt.s32.f32 %v403
        %v411 = vmul.f32 %v410, %v408
        %v412 = vxor.u32 %v411, 2147483648
        %v413 = vsel %vm330, %v412, %v411
        %v414 = vsub.s32 4, %v390
        %v415 = vsel %vm330, %v414, %v390
        %v416 = vsel %vm329, %v327, %v413
        %v417 = vsel %vm329, 0, %v415
        %v418 = vcosq.f32.pop %v416
        %v419 = vsinq.f32.pop %v416
        %vm420 = vweird.f32 %v327
        %v421 = vadd.s32 %v417, 3
        %v422 = vand.u32 %v421, 3
        %vm423 = vcmp.lt.s32.totalorder %v422, 2
        %vm424 = vcmp.eq.s32.totalorder %v422, 0
        %v425 = vxor.u32 %v419, 2147483648
        %v426 = vsel %vm424, %v418, %v425
        %vm427 = vcmp.eq.s32.totalorder %v422, 2
        %v428 = vxor.u32 %v418, 2147483648
        %v429 = vsel %vm427, %v428, %v419
        %v430 = vsel %vm423, %v426, %v429
        %v431 = vsel %vm420, nan, %v430
        %v432 = vpack.c.bf16 %v431, %v431
        %v433 = vld [vmem:[#allocation2] sm:$0xf]
        %v434 = vld [vmem:[#allocation2 + $0x4] sm:$0xf]
        %v435 = vld [vmem:[#allocation2 + $0x8] sm:$0xf]
        %v436 = vld [vmem:[#allocation2 + $0xc] sm:$0xf]
        %v437 = vld [vmem:[#allocation2 + $0x10] sm:$0xf]
        %v438 = vld [vmem:[#allocation2 + $0x14] sm:$0xf]
        %v439 = vld [vmem:[#allocation2 + $0x18] sm:$0xf]
        %v440 = vld [vmem:[#allocation2 + $0x1c] sm:$0xf]
        %v441 = vld [vmem:[#allocation2 + $0x20] sm:$0xf]
        %v442 = vld [vmem:[#allocation2 + $0x24] sm:$0xf]
        %v443 = vld [vmem:[#allocation2 + $0x28] sm:$0xf]
        %v444 = vld [vmem:[#allocation2 + $0x2c] sm:$0xf]
        %v445 = vld [vmem:[#allocation2 + $0x30] sm:$0xf]
        %v446 = vld [vmem:[#allocation2 + $0x34] sm:$0xf]
        %v447 = vld [vmem:[#allocation2 + $0x38] sm:$0xf]
        %v448 = vld [vmem:[#allocation2 + $0x3c] sm:$0xf]
        %v449 = vld [vmem:[%s4] sm:$0x1]
        %v451 = vlaneseq
        %v452 = vshrl.u32 %v451, 7
        %v453 = vsub.s32 0, %v452
        %v454 = vrot.slane %v449, %v453
        %v472 = vunpack.c.l.b16 %v433
        %v473 = vunpack.c.l.b16 %v434
        %v474 = vunpack.c.l.b16 %v435
        %v475 = vunpack.c.l.b16 %v436
        %v476 = vunpack.c.l.b16 %v437
        %v477 = vunpack.c.l.b16 %v438
        %v478 = vunpack.c.l.b16 %v439
        %v479 = vunpack.c.l.b16 %v440
        %v480 = vunpack.c.l.b16 %v441
        %v481 = vunpack.c.l.b16 %v442
        %v482 = vunpack.c.l.b16 %v443
        %v483 = vunpack.c.l.b16 %v444
        %v484 = vunpack.c.l.b16 %v445
        %v485 = vunpack.c.l.b16 %v446
        %v486 = vunpack.c.l.b16 %v447
        %v487 = vunpack.c.l.b16 %v448
        %v488 = vpack.c.b16 %v473, %v472
        %v489 = vpack.c.b16 %v475, %v474
        %v490 = vpack.c.b16 %v477, %v476
        %v491 = vpack.c.b16 %v479, %v478
        %v492 = vpack.c.b16 %v481, %v480
        %v493 = vpack.c.b16 %v483, %v482
        %v494 = vpack.c.b16 %v485, %v484
        %v495 = vpack.c.b16 %v487, %v486
        %504 = vmatprep.subr.bf16.mxu0 0
        %505 = vmatpush1.bf16.msra.mxu0 %v488
        %506 = vmatprep.subr.bf16.mxu0 0
        %507 = vmatpush1.bf16.msra.mxu0 %v489
        %508 = vmatprep.subr.bf16.mxu0 0
        %509 = vmatpush1.bf16.msra.mxu0 %v490
        %510 = vmatprep.subr.bf16.mxu0 0
        %511 = vmatpush1.bf16.msra.mxu0 %v491
        %512 = vmatprep.subr.bf16.mxu0 0
        %513 = vmatpush1.bf16.msra.mxu0 %v492
        %514 = vmatprep.subr.bf16.mxu0 0
        %515 = vmatpush1.bf16.msra.mxu0 %v493
        %516 = vmatprep.subr.bf16.mxu0 0
        %517 = vmatpush1.bf16.msra.mxu0 %v494
        %518 = vmatprep.subr.bf16.mxu0 0
        %519 = vmatpush1.bf16.msra.mxu0 %v495
        %520 = vmatprep.subr.bf16.mxu0 0
        %521 = vmatpush1.bf16.msra.mxu0 0
        %522 = vmatprep.subr.bf16.mxu0 0
        %523 = vmatpush1.bf16.msra.mxu0 0
        %524 = vmatprep.subr.bf16.mxu0 0
        %525 = vmatpush1.bf16.msra.mxu0 0
        %526 = vmatprep.subr.bf16.mxu0 0
        %527 = vmatpush1.bf16.msra.mxu0 0
        %528 = vmatprep.subr.bf16.mxu0 0
        %529 = vmatpush1.bf16.msra.mxu0 0
        %530 = vmatprep.subr.bf16.mxu0 0
        %531 = vmatpush1.bf16.msra.mxu0 0
        %532 = vmatprep.subr.bf16.mxu0 0
        %533 = vmatpush1.bf16.msra.mxu0 0
        %534 = vmatprep.subr.bf16.mxu0 0
        %535 = vmatpush1.bf16.msra.mxu0 0
        %536 = vmatprep.mubr.bf16.mxu0 0
        %537 = vmatmul.mubr.bf16.gmra.mrb[0].mxu0 %v432
        %v538 = vpop.f32.mrb[0].mxu0
        %v539 = vadd.f32 %v454, %v538
        %v540 = vpop.f32.mrb[0].mxu0
        %v541 = vpop.f32.mrb[0].mxu0
        %v542 = vpop.f32.mrb[0].mxu0
        %543 = vdwg.mxu0
        %v544 = vxor.u32 %v539, 2147483648
        %v545 = vmul.f32 %v544, 1.442695
        %v546 = vpow.pop %v545
        %v547 = vadd.f32 %v546, 1.0
        %v548 = vrcp.pop %v547
        %v549 = vmul.f32 1.0, %v548
        %v550 = vmul.f32 %v539, %v549
        %v551 = vpack.c.bf16 %v550, %v550
        %v552 = vld [vmem:[#allocation5] sm:$0xf]
        %v553 = vld [vmem:[#allocation5 + $0x4] sm:$0xf]
        %v554 = vld [vmem:[#allocation5 + $0x8] sm:$0xf]
        %v555 = vld [vmem:[#allocation5 + $0xc] sm:$0xf]
        %v556 = vld [vmem:[#allocation5 + $0x10] sm:$0xf]
        %v557 = vld [vmem:[#allocation5 + $0x14] sm:$0xf]
        %v558 = vld [vmem:[#allocation5 + $0x18] sm:$0xf]
        %v559 = vld [vmem:[#allocation5 + $0x1c] sm:$0xf]
        %v560 = vld [vmem:[#allocation5 + $0x20] sm:$0xf]
        %v561 = vld [vmem:[#allocation5 + $0x24] sm:$0xf]
        %v562 = vld [vmem:[#allocation5 + $0x28] sm:$0xf]
        %v563 = vld [vmem:[#allocation5 + $0x2c] sm:$0xf]
        %v564 = vld [vmem:[#allocation5 + $0x30] sm:$0xf]
        %v565 = vld [vmem:[#allocation5 + $0x34] sm:$0xf]
        %v566 = vld [vmem:[#allocation5 + $0x38] sm:$0xf]
        %v567 = vld [vmem:[#allocation5 + $0x3c] sm:$0xf]
        %v568 = vld [vmem:[%s6] sm:$0x1]
        %v570 = vlaneseq
        %v571 = vshrl.u32 %v570, 7
        %v572 = vsub.s32 0, %v571
        %v573 = vrot.slane %v568, %v572
        %v591 = vunpack.c.l.b16 %v552
        %v592 = vunpack.c.l.b16 %v553
        %v593 = vunpack.c.l.b16 %v554
        %v594 = vunpack.c.l.b16 %v555
        %v595 = vunpack.c.l.b16 %v556
        %v596 = vunpack.c.l.b16 %v557
        %v597 = vunpack.c.l.b16 %v558
        %v598 = vunpack.c.l.b16 %v559
        %v599 = vunpack.c.l.b16 %v560
        %v600 = vunpack.c.l.b16 %v561
        %v601 = vunpack.c.l.b16 %v562
        %v602 = vunpack.c.l.b16 %v563
        %v603 = vunpack.c.l.b16 %v564
        %v604 = vunpack.c.l.b16 %v565
        %v605 = vunpack.c.l.b16 %v566
        %v606 = vunpack.c.l.b16 %v567
        %v607 = vpack.c.b16 %v592, %v591
        %v608 = vpack.c.b16 %v594, %v593
        %v609 = vpack.c.b16 %v596, %v595
        %v610 = vpack.c.b16 %v598, %v597
        %v611 = vpack.c.b16 %v600, %v599
        %v612 = vpack.c.b16 %v602, %v601
        %v613 = vpack.c.b16 %v604, %v603
        %v614 = vpack.c.b16 %v606, %v605
        %623 = vmatprep.subr.bf16.mxu0 0
        %624 = vmatpush1.bf16.msra.mxu0 %v607
        %625 = vmatprep.subr.bf16.mxu0 0
        %626 = vmatpush1.bf16.msra.mxu0 %v608
        %627 = vmatprep.subr.bf16.mxu0 0
        %628 = vmatpush1.bf16.msra.mxu0 %v609
        %629 = vmatprep.subr.bf16.mxu0 0
        %630 = vmatpush1.bf16.msra.mxu0 %v610
        %631 = vmatprep.subr.bf16.mxu0 0
        %632 = vmatpush1.bf16.msra.mxu0 %v611
        %633 = vmatprep.subr.bf16.mxu0 0
        %634 = vmatpush1.bf16.msra.mxu0 %v612
        %635 = vmatprep.subr.bf16.mxu0 0
        %636 = vmatpush1.bf16.msra.mxu0 %v613
        %637 = vmatprep.subr.bf16.mxu0 0
        %638 = vmatpush1.bf16.msra.mxu0 %v614
        %639 = vmatprep.subr.bf16.mxu0 0
        %640 = vmatpush1.bf16.msra.mxu0 0
        %641 = vmatprep.subr.bf16.mxu0 0
        %642 = vmatpush1.bf16.msra.mxu0 0
        %643 = vmatprep.subr.bf16.mxu0 0
        %644 = vmatpush1.bf16.msra.mxu0 0
        %645 = vmatprep.subr.bf16.mxu0 0
        %646 = vmatpush1.bf16.msra.mxu0 0
        %647 = vmatprep.subr.bf16.mxu0 0
        %648 = vmatpush1.bf16.msra.mxu0 0
        %649 = vmatprep.subr.bf16.mxu0 0
        %650 = vmatpush1.bf16.msra.mxu0 0
        %651 = vmatprep.subr.bf16.mxu0 0
        %652 = vmatpush1.bf16.msra.mxu0 0
        %653 = vmatprep.subr.bf16.mxu0 0
        %654 = vmatpush1.bf16.msra.mxu0 0
        %655 = vmatprep.mubr.bf16.mxu0 0
        %656 = vmatmul.mubr.bf16.gmra.mrb[0].mxu0 %v551
        %v657 = vpop.f32.mrb[0].mxu0
        %v658 = vadd.f32 %v573, %v657
        %v659 = vpop.f32.mrb[0].mxu0
        %v660 = vpop.f32.mrb[0].mxu0
        %v661 = vpop.f32.mrb[0].mxu0
        %662 = vdwg.mxu0
        %663 = vst [vmem:[%s299] sm:$0xff] %v658
        %s664 = sand.u32 %s183, 1
        %s665 = scalar_lea.sflag [#allocation4], %s664
        %s666 = sand.u32 %s183, 1
        %s667 = smul.addr %s666, 8
        %s668 = scalar_lea.vmem [#allocation7], %s667
        // Predicated region
        $region57: #{tpu_custom_call.1} parent=47 // pred_check
          %p669 = pneg %p193
        $region58: #{tpu_custom_call.1} parent=47 // pred_check_branch
          %671 = sbr.rel (%p669) target = $region60
        $region59: #{tpu_custom_call.1} parent=47 // pred_region
          %s673 = ssub.s32 128, 128
          %674 = vsyncadd %s665, %s673
          %s675 = smul.addr %s23, 128
          %s676 = scalar_lea.hbm %s7, %s675
          %s678 = sshll.u32 %s668, 4
          %s679 = int_to_ptr.vmem [resolvable:$true] %s678
          %681 = dma.vmem_to_hbm [thread:$0]  %s679, 128, %s676, %s665
        $region60: #{tpu_custom_call.1} parent=47 // pred_fallthru
          _
      $region48: #{tpu_custom_call.1} parent=5 // pred_fallthru
        _
      %p682 = scmp.le.s32.totalorder 2, %s18
      // Predicated region
      $region61: #{tpu_custom_call.1} parent=5 // pred_check
        %p683 = pneg %p682
      $region62: #{tpu_custom_call.1} parent=5 // pred_check_branch
        %685 = sbr.rel (%p683) target = $region64
      $region63: #{tpu_custom_call.1} parent=5 // pred_region
        %s686 = ssub.s32 %s18, 2
        // Predicated region
        $region65: #{tpu_custom_call.1} parent=63 // pred_check
          %p687 = pneg %p199
        $region66: #{tpu_custom_call.1} parent=63 // pred_check_branch
          %689 = sbr.rel (%p687) target = $region68
        $region67: #{tpu_custom_call.1} parent=63 // pred_region
          %s690 = sand.u32 %s184, 1
          %s691 = scalar_lea.sflag [#allocation4], %s690
          %s692 = sand.u32 %s184, 1
          %s693 = smul.addr %s692, 8
          %s694 = scalar_lea.vmem [#allocation7], %s693
          %695 = dma.done %s691, 128
        $region68: #{tpu_custom_call.1} parent=63 // pred_fallthru
          _
      $region64: #{tpu_custom_call.1} parent=5 // pred_fallthru
        _
    $region6: #{tpu_custom_call.1} parent=1 // loop_footer
      %s22 = sadd.s32 1, %s18
    $region7: #{tpu_custom_call.1} parent=1 // loop_footer_branch
      %17 = sbr.rel target = $region3
    $region8: #{tpu_custom_call.1} parent=1 // loop_exit
      _
    %696 = vsyncpa [#allocation3], 1
    %s697 = scalar_lea.sflag [#allocation3], 1
    %698 = vsyncpa %s697, 1
    %699 = vsyncpa [#allocation6], 1
    %700 = vsyncpa [#allocation4], 1
    %s701 = scalar_lea.sflag [#allocation4], 1
    %702 = vsyncpa %s701, 1

</llo_original>
